<compile_context>
chip_gen: v7x
topology: tpu7x:2x2x1
jax: 0.10.0
libtpu: 0.0.40
codegen_flags: <defaults>
</compile_context>

<pallas_src>
import jax
import jax.numpy as jnp
from jax.experimental import pallas as pl
from jax.experimental.pallas import tpu as pltpu

jax.config.update("jax_default_matmul_precision", "highest")

ALPHA = 0.2          # LeakyReLU negative slope
MASK_VAL = -9e15     # matches -9000000000000000.0 in the reference

# ---- demo model configuration (small shapes) -------------------------------
B = 2
HIDDEN = 32
HEADS = 4
EMO_OUT = 7
PKL_OUT = 5
MODALITIES = {"body": 64, "face": 32, "scene": 48, "audio": 16, "text": 16}


def _round_up(x, m):
    return ((x + m - 1) // m) * m


# =============================================================================
# Kernel 1: fused ModalityProjector + AdapterFusion (per modality, eval mode)
# =============================================================================
def _proj_adapter_kernel(x_ref, w1_ref, b1_ref, g1_ref, be1_ref,
                         wd_ref, bd_ref, wu_ref, bu_ref, g2_ref, be2_ref,
                         o_ref):
    x = x_ref[...]                                                    # (R, Din)
    h = jnp.dot(x, w1_ref[...], preferred_element_type=jnp.float32) + b1_ref[...]
    h = jnp.maximum(h, 0.0)                                           # ReLU (dropout = id)
    mu = jnp.mean(h, axis=-1, keepdims=True)                          # LayerNorm
    var = jnp.mean((h - mu) ** 2, axis=-1, keepdims=True)
    h = (h - mu) * jax.lax.rsqrt(var + 1e-5) * g1_ref[...] + be1_ref[...]

    a = jnp.dot(h, wd_ref[...], preferred_element_type=jnp.float32) + bd_ref[...]
    a = jnp.maximum(a, 0.0)
    a = jnp.dot(a, wu_ref[...], preferred_element_type=jnp.float32) + bu_ref[...]

    y = h + a                                                         # residual
    mu2 = jnp.mean(y, axis=-1, keepdims=True)                         # LayerNorm
    var2 = jnp.mean((y - mu2) ** 2, axis=-1, keepdims=True)
    o_ref[...] = ((y - mu2) * jax.lax.rsqrt(var2 + 1e-5) * g2_ref[...]
                  + be2_ref[...]).astype(o_ref.dtype)


def fused_projector_adapter(x, p):
    """x: (B, Din) -> (B, HIDDEN). Whole arrays fit VMEM (tiny per-modality tensors)."""
    Bx, _ = x.shape
    Dh = p["w1"].shape[1]
    row = lambda v: v.reshape(1, -1)
    return pl.pallas_call(
        _proj_adapter_kernel,
        out_shape=jax.ShapeDtypeStruct((Bx, Dh), jnp.float32),
    )(x, p["w1"], row(p["b1"]), row(p["g1"]), row(p["bb1"]),
      p["wd"], row(p["bd"]), p["wu"], row(p["bu"]), row(p["g2"]), row(p["bb2"]))


# =============================================================================
# Kernel 2: batched GAT projection  (B*N rows) x (D, Dp) augmented weight
# =============================================================================
def _gat_proj_kernel(x_ref, w_ref, o_ref):
    o_ref[...] = jnp.dot(x_ref[...], w_ref[...],
                         preferred_element_type=jnp.float32).astype(o_ref.dtype)


# =============================================================================
# Kernel 3: tiled masked graph attention with online (flash-style) softmax
# =============================================================================
def _gat_attn_kernel(f1_ref, f2_ref, adj_ref, v_ref, o_ref, m_sc, l_sc, acc_sc):
    ki = pl.program_id(2)

    @pl.when(ki == 0)
    def _():
        m_sc[...] = jnp.full(m_sc.shape, -jnp.inf, m_sc.dtype)
        l_sc[...] = jnp.zeros(l_sc.shape, l_sc.dtype)
        acc_sc[...] = jnp.zeros(acc_sc.shape, acc_sc.dtype)

    f1 = f1_ref[0]                                   # (TQ, 1)  queries
    f2 = f2_ref[0]                                   # (1, TK)  keys (lane-major, no transpose)
    s = f1 + f2                                      # (TQ, TK) outer sum
    lrelu = jnp.maximum(s, ALPHA * s)                # LeakyReLU as a single max
    e = jnp.where(adj_ref[0] > 0, lrelu, MASK_VAL)   # single masked select (int8 adjacency)

    m_prev = m_sc[...]
    m_new = jnp.maximum(m_prev, jnp.max(e, axis=-1, keepdims=True))
    corr = jnp.exp(m_prev - m_new)                   # exp(-inf - finite) = 0 on first tile
    p = jnp.exp(e - m_new)
    l_sc[...] = corr * l_sc[...] + jnp.sum(p, axis=-1, keepdims=True)
    acc_sc[...] = corr * acc_sc[...] + jnp.dot(p, v_ref[0],
                                               preferred_element_type=jnp.float32)
    m_sc[...] = m_new

    @pl.when(ki == pl.num_programs(2) - 1)
    def _():
        l = l_sc[...]
        inv = pl.reciprocal(l, approx=True)          # EUP slot
        inv = inv * (2.0 - l * inv)                  # one Newton step -> ~f32 accuracy
        o_ref[0] = (acc_sc[...] * inv).astype(o_ref.dtype)


def graph_attention_layer(h, adj, W, a, *, node_tile=128):
    """GraphAttentionLayer forward (eval).  h: (B,N,D), adj: (B,N,N), W: (D,Dout), a: (2*Dout,1).

    node_tile: attention tile size along the node axis when N > 128. 128 keeps the
    per-step VMEM footprint (~2.5 MiB at Dout=1024 with double-buffering) well under
    v7x's 32 MiB scoped limit / 64 MiB VMEM; on v5e/v6e (128 MiB VMEM) raise to
    256-512 to amortize the ~0.35 us per-grid-step overhead. Must be a multiple of 128.
    """
    Bh, N, D = h.shape
    Dout = W.shape[1]

    # ---- augmented weight: [W | W@a1 | W@a2 | zero pad] -> lane width multiple of 128
    Dp = _round_up(Dout + 2, 128)
    wa1 = W @ a[:Dout, :]                              # (D, 1)
    wa2 = W @ a[Dout:, :]                              # (D, 1)
    W_aug = jnp.zeros((D, Dp), h.dtype)
    W_aug = W_aug.at[:, :Dout].set(W)
    W_aug = W_aug.at[:, Dout:Dout + 1].set(wa1)
    W_aug = W_aug.at[:, Dout + 1:Dout + 2].set(wa2)

    # ---- node-axis padding / tiling
    T = node_tile if N > node_tile else _round_up(N, 8)
    Np = _round_up(N, T)
    h_p = jnp.zeros((Bh, Np, D), h.dtype).at[:, :N, :].set(h)
    adj_p = jnp.zeros((Bh, Np, Np), jnp.int8).at[:, :N, :N].set((adj > 0).astype(jnp.int8))

    # ---- stage 1: projection batched over all (B*Np) rows (fills the MXU, one W stream)
    M = Bh * Np
    TM = 128 if M > 128 else M
    Mp = _round_up(M, TM)
    x_flat = jnp.zeros((Mp, D), h.dtype).at[:M].set(h_p.reshape(M, D))
    proj = pl.pallas_call(
        _gat_proj_kernel,
        out_shape=jax.ShapeDtypeStruct((Mp, Dp), jnp.float32),
        grid_spec=pltpu.PrefetchScalarGridSpec(
            num_scalar_prefetch=0,
            grid=(Mp // TM,),
            in_specs=[pl.BlockSpec((TM, D), lambda i: (i, 0)),
                      pl.BlockSpec((D, Dp), lambda i: (0, 0))],
            out_specs=pl.BlockSpec((TM, Dp), lambda i: (i, 0))),
        compiler_params=pltpu.CompilerParams(dimension_semantics=("parallel",)),
    )(x_flat, W_aug)
    proj = proj[:M].reshape(Bh, Np, Dp)                # [:, :, :Dout]=Wh, [Dout]=f1, [Dout+1]=f2

    f1 = proj[:, :, Dout:Dout + 1]                                   # (B, Np, 1)
    f2r = jnp.transpose(proj[:, :, Dout + 1:Dout + 2], (0, 2, 1))    # (B, 1, Np) lane-major

    # ---- stage 2: tiled masked softmax + aggregation (flash-style over k tiles)
    nq = Np // T
    nk = Np // T
    out = pl.pallas_call(
        _gat_attn_kernel,
        out_shape=jax.ShapeDtypeStruct((Bh, Np, Dp), h.dtype),
        grid_spec=pltpu.PrefetchScalarGridSpec(
            num_scalar_prefetch=0,
            grid=(Bh, nq, nk),
            in_specs=[
                pl.BlockSpec((1, T, 1), lambda b, qi, ki: (b, qi, 0)),    # f1 (queries)
                pl.BlockSpec((1, 1, T), lambda b, qi, ki: (b, 0, ki)),    # f2 (keys, row layout)
                pl.BlockSpec((1, T, T), lambda b, qi, ki: (b, qi, ki)),   # adjacency (int8)
                pl.BlockSpec((1, T, Dp), lambda b, qi, ki: (b, ki, 0)),   # values (Wh, lane-dense)
            ],
            out_specs=pl.BlockSpec((1, T, Dp), lambda b, qi, ki: (b, qi, 0)),
            scratch_shapes=[pltpu.VMEM((T, 1), jnp.float32),   # running max
                            pltpu.VMEM((T, 1), jnp.float32),   # running sum
                            pltpu.VMEM((T, Dp), jnp.float32)]  # running weighted sum
        ),
        compiler_params=pltpu.CompilerParams(
            dimension_semantics=("parallel", "parallel", "arbitrary")),
    )(f1, f2r, adj_p, proj)

    return out[:, :N, :Dout]                           # drop node padding + extra lanes


# =============================================================================
# Pure-JAX references and shared glue (cross-attention, heads, cosine sim)
# =============================================================================
def _layernorm(x, g, b, eps=1e-5):
    mu = jnp.mean(x, axis=-1, keepdims=True)
    var = jnp.mean((x - mu) ** 2, axis=-1, keepdims=True)
    return (x - mu) * jax.lax.rsqrt(var + eps) * g + b


def _ref_projector_adapter(x, p):
    h = jnp.maximum(x @ p["w1"] + p["b1"], 0.0)
    h = _layernorm(h, p["g1"], p["bb1"])
    a = jnp.maximum(h @ p["wd"] + p["bd"], 0.0)
    a = a @ p["wu"] + p["bu"]
    return _layernorm(h + a, p["g2"], p["bb2"])


def _ref_gat(h, adj, W, a, alpha=ALPHA):
    """Direct translation of the PyTorch concat-then-matmul GAT forward (eval)."""
    Wh = jnp.einsum("bnd,de->bne", h, W)
    Bh, N, Dout = Wh.shape
    Wh_i = jnp.broadcast_to(Wh[:, :, None, :], (Bh, N, N, Dout))
    Wh_j = jnp.broadcast_to(Wh[:, None, :, :], (Bh, N, N, Dout))
    e = jnp.squeeze(jnp.concatenate([Wh_i, Wh_j], axis=-1) @ a, axis=-1)
    e = jnp.where(e > 0, e, alpha * e)
    e = jnp.where(adj > 0, e, MASK_VAL)
    attn = jax.nn.softmax(e, axis=-1)
    return jnp.einsum("bnm,bmd->bnd", attn, Wh)


def _mha_single_query(q, kv, p, num_heads):
    """nn.MultiheadAttention (batch_first, eval). q: (B,1,D), kv: (B,N,D)."""
    Bq, Lq, D = q.shape
    dh = D // num_heads
    qp = q @ p["wq"] + p["bq"]
    kp = kv @ p["wk"] + p["bk"]
    vp = kv @ p["wv"] + p["bv"]
    split = lambda x: x.reshape(x.shape[0], x.shape[1], num_heads, dh).transpose(0, 2, 1, 3)
    qh, kh, vh = split(qp), split(kp), split(vp)
    s = jnp.einsum("bhqd,bhkd->bhqk", qh, kh) / (dh ** 0.5)
    w = jax.nn.softmax(s, axis=-1)
    o = jnp.einsum("bhqk,bhkd->bhqd", w, vh).transpose(0, 2, 1, 3).reshape(Bq, Lq, D)
    return o @ p["wo"] + p["bo"]


def _cosine_sim(x, g, eps=1e-8):
    xn = jnp.maximum(jnp.linalg.norm(x, axis=-1, keepdims=True), eps)
    gn = jnp.maximum(jnp.linalg.norm(g, axis=-1, keepdims=True), eps)
    return (x / xn) @ (g / gn).T


def multimodal_fusion_forward(params, batch, *, use_pallas=True):
    feats = batch["features"]
    x_mods, valid = [], []
    for mod in MODALITIES:
        feat = feats.get(mod)
        if feat is None or mod not in params["projectors"]:
            continue
        p = params["projectors"][mod]
        x = fused_projector_adapter(feat, p) if use_pallas else _ref_projector_adapter(feat, p)
        x_mods.append(x)
        valid.append(mod)
    if not x_mods:
        raise ValueError("No valid modality features found")
    x = jnp.stack(x_mods, axis=1)                       # (B, N, D)
    Bx, N, D = x.shape
    adj = jnp.ones((Bx, N, N), jnp.float32)

    if use_pallas:
        context = graph_attention_layer(x, adj, params["gat_W"], params["gat_a"])
    else:
        context = _ref_gat(x, adj, params["gat_W"], params["gat_a"])

    emo_q = jnp.broadcast_to(params["emo_query"], (Bx, 1, D))
    pkl_q = jnp.broadcast_to(params["pkl_query"], (Bx, 1, D))
    emo_repr = _mha_single_query(emo_q, context, params["cross_attn"], HEADS)[:, 0]
    pkl_repr = _mha_single_query(pkl_q, context, params["cross_attn"], HEADS)[:, 0]

    emo_mean = jnp.mean(jnp.stack([batch["emotion_logits"][m] for m in valid]), axis=0)
    per_mean = jnp.mean(jnp.stack([batch["personality_scores"][m] for m in valid]), axis=0)
    emo_repr = emo_repr + emo_mean @ params["emo_logit_proj_w"] + params["emo_logit_proj_b"]
    pkl_repr = pkl_repr + per_mean @ params["per_logit_proj_w"] + params["per_logit_proj_b"]

    emo_pred = emo_repr @ params["emo_head_w"] + params["emo_head_b"]
    pkl_pred = jax.nn.sigmoid(pkl_repr @ params["pkl_head_w"] + params["pkl_head_b"])
    emo_sim = _cosine_sim(emo_repr, params["guide_emo"])
    pkl_sim = _cosine_sim(pkl_repr, params["guide_pkl"])
    return {"emotion_logits": (emo_pred + emo_sim) / 2.0,
            "personality_scores": (pkl_pred + jax.nn.sigmoid(pkl_sim)) / 2.0}


# =============================================================================
# Parameter / batch construction
# =============================================================================
def init_params(key):
    keys = iter(jax.random.split(key, 128))
    nrm = lambda shape, s=0.1: s * jax.random.normal(next(keys), shape, dtype=jnp.float32)
    params = {"projectors": {}}
    for mod, din in MODALITIES.items():
        params["projectors"][mod] = dict(
            w1=nrm((din, HIDDEN)), b1=nrm((HIDDEN,)),
            g1=jnp.ones((HIDDEN,), jnp.float32) + nrm((HIDDEN,), 0.01), bb1=nrm((HIDDEN,)),
            wd=nrm((HIDDEN, HIDDEN // 2)), bd=nrm((HIDDEN // 2,)),
            wu=nrm((HIDDEN // 2, HIDDEN)), bu=nrm((HIDDEN,)),
            g2=jnp.ones((HIDDEN,), jnp.float32) + nrm((HIDDEN,), 0.01), bb2=nrm((HIDDEN,)))
    params["gat_W"] = nrm((HIDDEN, HIDDEN), 0.2)
    params["gat_a"] = nrm((2 * HIDDEN, 1), 0.2)
    params["emo_query"] = nrm((1, 1, HIDDEN), 1.0)
    params["pkl_query"] = nrm((1, 1, HIDDEN), 1.0)
    params["cross_attn"] = dict(
        wq=nrm((HIDDEN, HIDDEN)), bq=nrm((HIDDEN,)),
        wk=nrm((HIDDEN, HIDDEN)), bk=nrm((HIDDEN,)),
        wv=nrm((HIDDEN, HIDDEN)), bv=nrm((HIDDEN,)),
        wo=nrm((HIDDEN, HIDDEN)), bo=nrm((HIDDEN,)))
    params["emo_head_w"] = nrm((HIDDEN, EMO_OUT)); params["emo_head_b"] = nrm((EMO_OUT,))
    params["pkl_head_w"] = nrm((HIDDEN, PKL_OUT)); params["pkl_head_b"] = nrm((PKL_OUT,))
    params["guide_emo"] = nrm((EMO_OUT, HIDDEN), 1.0)
    params["guide_pkl"] = nrm((PKL_OUT, HIDDEN), 1.0)
    params["emo_logit_proj_w"] = nrm((EMO_OUT, HIDDEN)); params["emo_logit_proj_b"] = nrm((HIDDEN,))
    params["per_logit_proj_w"] = nrm((PKL_OUT, HIDDEN)); params["per_logit_proj_b"] = nrm((HIDDEN,))
    return params


def make_batch(key):
    ks = iter(jax.random.split(key, 3 * len(MODALITIES)))
    feats, emo, per = {}, {}, {}
    for mod, din in MODALITIES.items():
        feats[mod] = jax.random.normal(next(ks), (B, din), dtype=jnp.float32)
        emo[mod] = jax.random.normal(next(ks), (B, EMO_OUT), dtype=jnp.float32)
        per[mod] = jax.random.normal(next(ks), (B, PKL_OUT), dtype=jnp.float32)
    return {"features": feats, "emotion_logits": emo, "personality_scores": per}


# =============================================================================
# Main
# =============================================================================
if __name__ == "__main__":
    root = jax.random.PRNGKey(0)
    k_params, k_batch, k_gat = jax.random.split(root, 3)

    # ---- check 1: standalone GAT kernel, N > 128 so the multi-tile online-softmax,
    #               node padding and adjacency masking paths are all exercised.
    kg1, kg2, kg3, kg4 = jax.random.split(k_gat, 4)
    Ng, Dg = 130, HIDDEN
    h_g = jax.random.normal(kg1, (B, Ng, Dg), dtype=jnp.float32)
    adj_g = (jax.random.uniform(kg2, (B, Ng, Ng)) > 0.5).astype(jnp.float32)
    adj_g = jnp.maximum(adj_g, jnp.eye(Ng, dtype=jnp.float32)[None, :, :])
    W_g = jax.random.uniform(kg3, (Dg, Dg), jnp.float32, -1.0, 1.0) * (6.0 / (2 * Dg)) ** 0.5
    a_g = jax.random.uniform(kg4, (2 * Dg, 1), jnp.float32, -1.0, 1.0) * 1.414 * (6.0 / (2 * Dg + 1)) ** 0.5

    out_gat = jax.block_until_ready(graph_attention_layer(h_g, adj_g, W_g, a_g))
    ref_gat = _ref_gat(h_g, adj_g, W_g, a_g)
    assert out_gat.shape == (B, Ng, Dg)
    assert jnp.allclose(out_gat, ref_gat, atol=1e-3, rtol=1e-3), "GAT kernel mismatch vs reference"

    # ---- check 2: full MultiModalFusionModel forward (Pallas path vs pure-JAX reference).
    params = init_params(k_params)
    batch = make_batch(k_batch)
    res_pallas = jax.block_until_ready(multimodal_fusion_forward(params, batch, use_pallas=True))
    res_ref = multimodal_fusion_forward(params, batch, use_pallas=False)

    assert res_pallas["emotion_logits"].shape == (B, EMO_OUT)
    assert res_pallas["personality_scores"].shape == (B, PKL_OUT)
    assert jnp.allclose(res_pallas["emotion_logits"], res_ref["emotion_logits"],
                        atol=2e-3, rtol=2e-3), "emotion_logits mismatch"
    assert jnp.allclose(res_pallas["personality_scores"], res_ref["personality_scores"],
                        atol=2e-3, rtol=2e-3), "personality_scores mismatch"

    print("KERNEL_OK")
</pallas_src>

<mosaic_0001>
module attributes {stable_mosaic.version = 11 : i64} {
  func.func @_gat_proj_kernel(%arg0: i32, %arg1: memref<128x32xf32, #tpu.memory_space<vmem>>, %arg2: memref<32x128xf32, #tpu.memory_space<vmem>>, %arg3: memref<128x128xf32, #tpu.memory_space<vmem>>) attributes {dimension_semantics = [#tpu.dimension_semantics<parallel>], iteration_bounds = array<i64: 4>, scalar_prefetch = 0 : i64, scratch_operands = 0 : i64, tpu.core_type = #tpu.core_type<tc>, window_params = [{transform_indices = @transform_0, window_bounds = array<i64: 128, 32>}, {pipeline_mode = #tpu.pipeline_mode<synchronous>, transform_indices = @transform_1, window_bounds = array<i64: 32, 128>}, {transform_indices = @transform_2, window_bounds = array<i64: 128, 128>}]} {
    %c0 = arith.constant 0 : index
    %c0_0 = arith.constant 0 : index
    %0 = vector.load %arg1[%c0, %c0_0] : memref<128x32xf32, #tpu.memory_space<vmem>>, vector<128x32xf32>
    %c0_1 = arith.constant 0 : index
    %c0_2 = arith.constant 0 : index
    %1 = vector.load %arg2[%c0_1, %c0_2] : memref<32x128xf32, #tpu.memory_space<vmem>>, vector<32x128xf32>
    %cst = arith.constant dense<0.000000e+00> : vector<128x128xf32>
    %2 = tpu.matmul %0, %1, %cst {dimension_numbers = #tpu.dot_dimension_numbers<[1], [0], [0], [1], [0, 0, 1, 1], [], []>, precision = #tpu.contract_precision<fp32>} : vector<128x32xf32>, vector<32x128xf32>, vector<128x128xf32> -> vector<128x128xf32>
    %c0_3 = arith.constant 0 : index
    %c0_4 = arith.constant 0 : index
    %3 = vector.load %arg3[%c0_3, %c0_4] : memref<128x128xf32, #tpu.memory_space<vmem>>, vector<128x128xf32>
    tpu.vector_store %arg3[%c0_3, %c0_4], %2 {strides = array<i32>} : memref<128x128xf32, #tpu.memory_space<vmem>>, vector<128x128xf32>,
    return
  }
  func.func @transform_0(%arg0: i32) -> (i32, i32) {
    %c0_i32 = arith.constant 0 : i32
    %c0_i32_0 = arith.constant 0 : i32
    return %arg0, %c0_i32 : i32, i32
  }
  func.func @transform_1(%arg0: i32) -> (i32, i32) {
    %c0_i32 = arith.constant 0 : i32
    %c0_i32_0 = arith.constant 0 : i32
    %c0_i32_1 = arith.constant 0 : i32
    return %c0_i32, %c0_i32_0 : i32, i32
  }
  func.func @transform_2(%arg0: i32) -> (i32, i32) {
    %c0_i32 = arith.constant 0 : i32
    %c0_i32_0 = arith.constant 0 : i32
    return %arg0, %c0_i32 : i32, i32
  }
}

</mosaic_0001>

<llo_original>
// kernel: tpu_custom_call.1
$region0: #{tpu_custom_call.1}
  #allocation0 [shape = 'u32[]', space=smem, size = 0x4, offset = 0x4, fixed_abs, tag = 'smem constant byte address 0x4 - core index']
  #allocation1 [shape = 'u32[144,128]{1,0:T(1,128)}', space=vmem, size = 0x12000, scoped, tag = 'internal scratch']
  %s0 = inlined_call_operand.vmem [shape: f32[512,32], index: 0, kind: input, shape index: {}]
  %s1 = inlined_call_operand.vmem [shape: f32[32,128], index: 1, kind: input, shape index: {}]
  %s2 = inlined_call_operand.hbm [shape: f32[512,128], index: 2, kind: output, shape index: {}]
  %s3 = sld [smem:[#allocation0]]
  $region41: #{tpu_custom_call.1} parent=0
    _
  %s5 = ssub.s32 1, %s3
  %s6 = scalar_select 0, %s5, %s3
  $region1: #{tpu_custom_call.1} parent=0
    #allocation2 [shape = 'u8[131072]{0}', space=vmem, size = 0x20000, scoped, tag = 'output window, operand 0']
    #allocation3 [shape = 's32[2]{0}', space=sflag, size = 0x8, scoped, tag = 'scoped memory for tpu_custom_call.1']
    %7 = vsyncpa [#allocation3], 0
    %s8 = scalar_lea.sflag [#allocation3], 1
    %9 = vsyncpa %s8, 0
    loop: start=0, step=1, limit=6
    $region2: #{tpu_custom_call.1} parent=1 // loop_pre_header
      _
    $region3: #{tpu_custom_call.1} parent=1 // loop_header
      %s11 = sphi 0, %s15
      %p12 = scmp.ge.s32.totalorder %s11, 6
      %s21 = sphi 0, %s23
      %s24 = sphi 0, %s21
      %s25 = sphi 0, %s24
      %s41 = sphi 0, %s25
      %s45 = sphi 0, %s45
      %s47 = sphi 0, %s45
      %s48 = sphi 0, %s47
      %s62 = sphi 0, %s48
      %s68 = sphi 0, %s70
      %s71 = sphi 0, %s68
      %s72 = sphi 0, %s71
      %s88 = sphi 0, %s72
    $region4: #{tpu_custom_call.1} parent=1 // loop_header_branch
      %14 = sbr.rel (%p12) target = $region8
    $region5: #{tpu_custom_call.1} parent=1 // loop_body
      %s16 = ssub.s32 %s11, 1
      %s17 = ssub.s32 %s11, 2
      %s18 = sadd.s32 %s11, 1
      %s19 = ssub.s32 %s11, %s18
      %p20 = scmp.eq.s32.totalorder %s19, 0
      %s22 = sadd.s32 %s21, 1
      %s23 = scalar_select %p20, %s21, %s22
      %p26 = pneg %p20
      %p27 = scmp.eq.s32.totalorder %s11, 3
      %p28 = por %p26, %p27
      %p29 = scmp.ne.s32.totalorder %s21, %s24
      %p30 = scmp.eq.s32.totalorder %s11, 0
      %p31 = por %p29, %p30
      %p32 = scmp.ne.s32.totalorder %s21, %s24
      %p33 = scmp.eq.s32.totalorder %s16, 3
      %p34 = por %p32, %p33
      %p35 = scmp.ne.s32.totalorder %s24, %s25
      %p36 = scmp.eq.s32.totalorder %s16, 0
      %p37 = por %p35, %p36
      %p38 = scmp.ne.s32.totalorder %s24, %s25
      %p39 = scmp.eq.s32.totalorder %s17, 3
      %p40 = por %p38, %p39
      %p42 = scmp.ne.s32.totalorder %s25, %s41
      %p43 = scmp.eq.s32.totalorder %s17, 0
      %p44 = por %p42, %p43
      %s46 = sadd.s32 %s45, 1
      %p49 = scmp.eq.s32.totalorder %s11, 3
      %p50 = scmp.ne.s32.totalorder %s45, %s47
      %p51 = scmp.eq.s32.totalorder %s11, 0
      %p52 = por %p50, %p51
      %p53 = scmp.ne.s32.totalorder %s45, %s47
      %p54 = scmp.eq.s32.totalorder %s16, 3
      %p55 = por %p53, %p54
      %p56 = scmp.ne.s32.totalorder %s47, %s48
      %p57 = scmp.eq.s32.totalorder %s16, 0
      %p58 = por %p56, %p57
      %p59 = scmp.ne.s32.totalorder %s47, %s48
      %p60 = scmp.eq.s32.totalorder %s17, 3
      %p61 = por %p59, %p60
      %p63 = scmp.ne.s32.totalorder %s48, %s62
      %p64 = scmp.eq.s32.totalorder %s17, 0
      %p65 = por %p63, %p64
      %s66 = ssub.s32 %s11, %s18
      %p67 = scmp.eq.s32.totalorder %s66, 0
      %s69 = sadd.s32 %s68, 1
      %s70 = scalar_select %p67, %s68, %s69
      %p73 = pneg %p67
      %p74 = scmp.eq.s32.totalorder %s11, 3
      %p75 = por %p73, %p74
      %p76 = scmp.ne.s32.totalorder %s68, %s71
      %p77 = scmp.eq.s32.totalorder %s11, 0
      %p78 = por %p76, %p77
      %p79 = scmp.ne.s32.totalorder %s68, %s71
      %p80 = scmp.eq.s32.totalorder %s16, 3
      %p81 = por %p79, %p80
      %p82 = scmp.ne.s32.totalorder %s71, %s72
      %p83 = scmp.eq.s32.totalorder %s16, 0
      %p84 = por %p82, %p83
      %p85 = scmp.ne.s32.totalorder %s71, %s72
      %p86 = scmp.eq.s32.totalorder %s17, 3
      %p87 = por %p85, %p86
      %p89 = scmp.ne.s32.totalorder %s72, %s88
      %p90 = scmp.eq.s32.totalorder %s17, 0
      %p91 = por %p89, %p90
      %p92 = scmp.le.s32.totalorder 1, %s11
      %p93 = scmp.lt.s32.totalorder %s11, 5
      %p94 = pnand %p92, %p93
      %p95 = pneg %p94
      // Predicated region
      $region9: #{tpu_custom_call.1} parent=5 // pred_check
        _
      $region10: #{tpu_custom_call.1} parent=5 // pred_check_branch
        %97 = sbr.rel (%p94) target = $region12
      $region11: #{tpu_custom_call.1} parent=5 // pred_region
        %s98 = ssub.s32 %s11, 1
        // Predicated region
        $region13: #{tpu_custom_call.1} parent=11 // pred_check
          %p99 = pneg %p58
        $region14: #{tpu_custom_call.1} parent=11 // pred_check_branch
          %101 = sbr.rel (%p99) target = $region16
        $region15: #{tpu_custom_call.1} parent=11 // pred_region
          _
        $region16: #{tpu_custom_call.1} parent=11 // pred_fallthru
          _
      $region12: #{tpu_custom_call.1} parent=5 // pred_fallthru
        _
      %p102 = scmp.lt.s32.totalorder %s11, 4
      // Predicated region
      $region17: #{tpu_custom_call.1} parent=5 // pred_check
        %p103 = pneg %p102
      $region18: #{tpu_custom_call.1} parent=5 // pred_check_branch
        %105 = sbr.rel (%p103) target = $region20
      $region19: #{tpu_custom_call.1} parent=5 // pred_region
        // Predicated region
        $region21: #{tpu_custom_call.1} parent=19 // pred_check
          %p106 = pneg %p31
        $region22: #{tpu_custom_call.1} parent=19 // pred_check_branch
          %108 = sbr.rel (%p106) target = $region24
        $region23: #{tpu_custom_call.1} parent=19 // pred_region
          %s109 = smul.u32 16, %s11
          %p110 = scmp.lt.s32.totalorder %s109, 63
          %s111 = scalar_select %p110, %s109, 63
          %s112 = smul.addr %s111, 8
          %s113 = scalar_lea.vmem %s0, %s112
          %s114 = smul.u32 16, %s11
        $region24: #{tpu_custom_call.1} parent=19 // pred_fallthru
          _
      $region20: #{tpu_custom_call.1} parent=5 // pred_fallthru
        _
      %p115 = scmp.le.s32.totalorder 1, %s11
      %p116 = scmp.lt.s32.totalorder %s11, 5
      %p117 = pnand %p115, %p116
      %p118 = pneg %p117
      // Predicated region
      $region25: #{tpu_custom_call.1} parent=5 // pred_check
        _
      $region26: #{tpu_custom_call.1} parent=5 // pred_check_branch
        %120 = sbr.rel (%p117) target = $region28
      $region27: #{tpu_custom_call.1} parent=5 // pred_region
        %s121 = ssub.s32 %s11, 1
        %s122 = smul.u32 16, %s16
        %p123 = scmp.lt.s32.totalorder %s122, 63
        %s124 = scalar_select %p123, %s122, 63
        %s125 = smul.addr %s124, 8
        %s126 = scalar_lea.vmem %s0, %s125
        %p127 = pneg %p37
        %p128 = pneg %p34
        %p129 = pneg %p58
        %p130 = pneg %p55
        %p131 = pneg %p84
        %p132 = pneg %p81
        %s133 = sand.u32 %s71, 1
        %s134 = scalar_lea.sflag [#allocation3], %s133
        %s135 = sand.u32 %s71, 1
        %s136 = smul.addr %s135, 128
        %s137 = scalar_lea.vmem [#allocation2], %s136
        %s138 = smul.u32 16, %s16
        %p139 = scmp.lt.s32.totalorder %s138, 63
        %s140 = scalar_select %p139, %s138, 63
        %s141 = smul.addr %s140, 8
        %s142 = scalar_lea.vmem %s0, %s141
        %s143 = smul.u32 16, %s16
        %s144 = smul.u32 16, %s16
        %v145 = vld [vmem:[%s142] sm:$0xff]
        %v146 = vld [vmem:[%s142 + $0x8] sm:$0xff]
        %v147 = vld [vmem:[%s142 + $0x10] sm:$0xff]
        %v148 = vld [vmem:[%s142 + $0x18] sm:$0xff]
        %v149 = vld [vmem:[%s142 + $0x20] sm:$0xff]
        %v150 = vld [vmem:[%s142 + $0x28] sm:$0xff]
        %v151 = vld [vmem:[%s142 + $0x30] sm:$0xff]
        %v152 = vld [vmem:[%s142 + $0x38] sm:$0xff]
        %v153 = vld [vmem:[%s142 + $0x40] sm:$0xff]
        %v154 = vld [vmem:[%s142 + $0x48] sm:$0xff]
        %v155 = vld [vmem:[%s142 + $0x50] sm:$0xff]
        %v156 = vld [vmem:[%s142 + $0x58] sm:$0xff]
        %v157 = vld [vmem:[%s142 + $0x60] sm:$0xff]
        %v158 = vld [vmem:[%s142 + $0x68] sm:$0xff]
        %v159 = vld [vmem:[%s142 + $0x70] sm:$0xff]
        %v160 = vld [vmem:[%s142 + $0x78] sm:$0xff]
        %v161 = vld [vmem:[%s1] sm:$0xff]
        %v162 = vld [vmem:[%s1 + $0x8] sm:$0xff]
        %v163 = vld [vmem:[%s1 + $0x10] sm:$0xff]
        %v164 = vld [vmem:[%s1 + $0x18] sm:$0xff]
        %vm165 = vcmask 261120
        %v167 = vsel %vm165, %v145, 0
        %v170 = vsel %vm165, %v146, 0
        %v173 = vsel %vm165, %v147, 0
        %v176 = vsel %vm165, %v148, 0
        %v179 = vsel %vm165, %v149, 0
        %v182 = vsel %vm165, %v150, 0
        %v185 = vsel %vm165, %v151, 0
        %v188 = vsel %vm165, %v152, 0
        %v191 = vsel %vm165, %v153, 0
        %v194 = vsel %vm165, %v154, 0
        %v197 = vsel %vm165, %v155, 0
        %v200 = vsel %vm165, %v156, 0
        %v203 = vsel %vm165, %v157, 0
        %v206 = vsel %vm165, %v158, 0
        %v209 = vsel %vm165, %v159, 0
        %v212 = vsel %vm165, %v160, 0
        %214 = vmatprep.subr.mxu0 0.0
        %v215 = vand.u32 %v161, 4294901760
        %216 = vmatpush1.msra.mxu0 %v215
        %217 = vmatprep.subr.mxu0 0.0
        %v218 = vand.u32 %v162, 4294901760
        %219 = vmatpush1.msra.mxu0 %v218
        %220 = vmatprep.subr.mxu0 0.0
        %v221 = vand.u32 %v163, 4294901760
        %222 = vmatpush1.msra.mxu0 %v221
        %223 = vmatprep.subr.mxu0 0.0
        %v224 = vand.u32 %v164, 4294901760
        %225 = vmatpush1.msra.mxu0 %v224
        %226 = vmatprep.subr.mxu0 0.0
        %227 = vmatpush1.msra.mxu0 0.0
        %228 = vmatprep.subr.mxu0 0.0
        %229 = vmatpush1.msra.mxu0 0.0
        %230 = vmatprep.subr.mxu0 0.0
        %231 = vmatpush1.msra.mxu0 0.0
        %232 = vmatprep.subr.mxu0 0.0
        %233 = vmatpush1.msra.mxu0 0.0
        %234 = vmatprep.subr.mxu0 0.0
        %235 = vmatpush1.msra.mxu0 0.0
        %236 = vmatprep.subr.mxu0 0.0
        %237 = vmatpush1.msra.mxu0 0.0
        %238 = vmatprep.subr.mxu0 0.0
        %239 = vmatpush1.msra.mxu0 0.0
        %240 = vmatprep.subr.mxu0 0.0
        %241 = vmatpush1.msra.mxu0 0.0
        %242 = vmatprep.subr.mxu0 0.0
        %243 = vmatpush1.msra.mxu0 0.0
        %244 = vmatprep.subr.mxu0 0.0
        %245 = vmatpush1.msra.mxu0 0.0
        %246 = vmatprep.subr.mxu0 0.0
        %247 = vmatpush1.msra.mxu0 0.0
        %248 = vmatprep.subr.mxu0 0.0
        %249 = vmatpush1.msra.mxu0 0.0
        %250 = vmatprep.subr.mxu0 0.0
        %251 = vmatpush1.msra.mxu0 0.0
        %252 = vmatprep.subr.mxu0 0.0
        %253 = vmatpush1.msra.mxu0 0.0
        %254 = vmatprep.subr.mxu0 0.0
        %255 = vmatpush1.msra.mxu0 0.0
        %256 = vmatprep.subr.mxu0 0.0
        %257 = vmatpush1.msra.mxu0 0.0
        %258 = vmatprep.subr.mxu0 0.0
        %259 = vmatpush1.msra.mxu0 0.0
        %260 = vmatprep.subr.mxu0 0.0
        %261 = vmatpush1.msra.mxu0 0.0
        %262 = vmatprep.subr.mxu0 0.0
        %263 = vmatpush1.msra.mxu0 0.0
        %264 = vmatprep.subr.mxu0 0.0
        %265 = vmatpush1.msra.mxu0 0.0
        %266 = vmatprep.subr.mxu0 0.0
        %267 = vmatpush1.msra.mxu0 0.0
        %268 = vmatprep.subr.mxu0 0.0
        %269 = vmatpush1.msra.mxu0 0.0
        %270 = vmatprep.subr.mxu0 0.0
        %271 = vmatpush1.msra.mxu0 0.0
        %272 = vmatprep.subr.mxu0 0.0
        %273 = vmatpush1.msra.mxu0 0.0
        %274 = vmatprep.subr.mxu0 0.0
        %275 = vmatpush1.msra.mxu0 0.0
        %276 = vmatprep.subr.mxu0 0.0
        %277 = vmatpush1.msra.mxu0 0.0
        %278 = vmatprep.subr.mxu0 0.0
        %279 = vmatpush1.msra.mxu0 0.0
        %280 = vmatprep.subr.mxu0 0.0
        %281 = vmatpush1.msra.mxu0 0.0
        %282 = vmatprep.mubr.f32.mxu0 0.0
        %v283 = vand.u32 %v167, 4294901760
        %v284 = vsub.f32 %v167, %v283
        %v285 = vand.u32 %v284, 4294901760
        %v286 = vsub.f32 %v284, %v285
        %v287 = vand.u32 %v286, 4294901760
        %288 = vmatmul.mubr.f32.gmra.mrb[0].mxu0 %v287
        %v289 = vpop.f32.mrb[0].mxu0
        %v290 = vadd.f32 0.0, %v289
        %v291 = vpop.f32.mrb[0].mxu0
        %292 = vmatprep.mubr.f32.mxu0 0.0
        %v293 = vand.u32 %v170, 4294901760
        %v294 = vsub.f32 %v170, %v293
        %v295 = vand.u32 %v294, 4294901760
        %v296 = vsub.f32 %v294, %v295
        %v297 = vand.u32 %v296, 4294901760
        %298 = vmatmul.mubr.f32.gmra.mrb[0].mxu0 %v297
        %v299 = vpop.f32.mrb[0].mxu0
        %v300 = vadd.f32 0.0, %v299
        %v301 = vpop.f32.mrb[0].mxu0
        %302 = vmatprep.mubr.f32.mxu0 0.0
        %v303 = vand.u32 %v173, 4294901760
        %v304 = vsub.f32 %v173, %v303
        %v305 = vand.u32 %v304, 4294901760
        %v306 = vsub.f32 %v304, %v305
        %v307 = vand.u32 %v306, 4294901760
        %308 = vmatmul.mubr.f32.gmra.mrb[0].mxu0 %v307
        %v309 = vpop.f32.mrb[0].mxu0
        %v310 = vadd.f32 0.0, %v309
        %v311 = vpop.f32.mrb[0].mxu0
        %312 = vmatprep.mubr.f32.mxu0 0.0
        %v313 = vand.u32 %v176, 4294901760
        %v314 = vsub.f32 %v176, %v313
        %v315 = vand.u32 %v314, 4294901760
        %v316 = vsub.f32 %v314, %v315
        %v317 = vand.u32 %v316, 4294901760
        %318 = vmatmul.mubr.f32.gmra.mrb[0].mxu0 %v317
        %v319 = vpop.f32.mrb[0].mxu0
        %v320 = vadd.f32 0.0, %v319
        %v321 = vpop.f32.mrb[0].mxu0
        %322 = vmatprep.mubr.f32.mxu0 0.0
        %v323 = vand.u32 %v179, 4294901760
        %v324 = vsub.f32 %v179, %v323
        %v325 = vand.u32 %v324, 4294901760
        %v326 = vsub.f32 %v324, %v325
        %v327 = vand.u32 %v326, 4294901760
        %328 = vmatmul.mubr.f32.gmra.mrb[0].mxu0 %v327
        %v329 = vpop.f32.mrb[0].mxu0
        %v330 = vadd.f32 0.0, %v329
        %v331 = vpop.f32.mrb[0].mxu0
        %332 = vmatprep.mubr.f32.mxu0 0.0
        %v333 = vand.u32 %v182, 4294901760
        %v334 = vsub.f32 %v182, %v333
        %v335 = vand.u32 %v334, 4294901760
        %v336 = vsub.f32 %v334, %v335
        %v337 = vand.u32 %v336, 4294901760
        %338 = vmatmul.mubr.f32.gmra.mrb[0].mxu0 %v337
        %v339 = vpop.f32.mrb[0].mxu0
        %v340 = vadd.f32 0.0, %v339
        %v341 = vpop.f32.mrb[0].mxu0
        %342 = vmatprep.mubr.f32.mxu0 0.0
        %v343 = vand.u32 %v185, 4294901760
        %v344 = vsub.f32 %v185, %v343
        %v345 = vand.u32 %v344, 4294901760
        %v346 = vsub.f32 %v344, %v345
        %v347 = vand.u32 %v346, 4294901760
        %348 = vmatmul.mubr.f32.gmra.mrb[0].mxu0 %v347
        %v349 = vpop.f32.mrb[0].mxu0
        %v350 = vadd.f32 0.0, %v349
        %v351 = vpop.f32.mrb[0].mxu0
        %352 = vmatprep.mubr.f32.mxu0 0.0
        %v353 = vand.u32 %v188, 4294901760
        %v354 = vsub.f32 %v188, %v353
        %v355 = vand.u32 %v354, 4294901760
        %v356 = vsub.f32 %v354, %v355
        %v357 = vand.u32 %v356, 4294901760
        %358 = vmatmul.mubr.f32.gmra.mrb[0].mxu0 %v357
        %v359 = vpop.f32.mrb[0].mxu0
        %v360 = vadd.f32 0.0, %v359
        %v361 = vpop.f32.mrb[0].mxu0
        %362 = vmatprep.mubr.f32.mxu0 0.0
        %v363 = vand.u32 %v191, 4294901760
        %v364 = vsub.f32 %v191, %v363
        %v365 = vand.u32 %v364, 4294901760
        %v366 = vsub.f32 %v364, %v365
        %v367 = vand.u32 %v366, 4294901760
        %368 = vmatmul.mubr.f32.gmra.mrb[0].mxu0 %v367
        %v369 = vpop.f32.mrb[0].mxu0
        %v370 = vadd.f32 0.0, %v369
        %v371 = vpop.f32.mrb[0].mxu0
        %372 = vmatprep.mubr.f32.mxu0 0.0
        %v373 = vand.u32 %v194, 4294901760
        %v374 = vsub.f32 %v194, %v373
        %v375 = vand.u32 %v374, 4294901760
        %v376 = vsub.f32 %v374, %v375
        %v377 = vand.u32 %v376, 4294901760
        %378 = vmatmul.mubr.f32.gmra.mrb[0].mxu0 %v377
        %v379 = vpop.f32.mrb[0].mxu0
        %v380 = vadd.f32 0.0, %v379
        %v381 = vpop.f32.mrb[0].mxu0
        %382 = vmatprep.mubr.f32.mxu0 0.0
        %v383 = vand.u32 %v197, 4294901760
        %v384 = vsub.f32 %v197, %v383
        %v385 = vand.u32 %v384, 4294901760
        %v386 = vsub.f32 %v384, %v385
        %v387 = vand.u32 %v386, 4294901760
        %388 = vmatmul.mubr.f32.gmra.mrb[0].mxu0 %v387
        %v389 = vpop.f32.mrb[0].mxu0
        %v390 = vadd.f32 0.0, %v389
        %v391 = vpop.f32.mrb[0].mxu0
        %392 = vmatprep.mubr.f32.mxu0 0.0
        %v393 = vand.u32 %v200, 4294901760
        %v394 = vsub.f32 %v200, %v393
        %v395 = vand.u32 %v394, 4294901760
        %v396 = vsub.f32 %v394, %v395
        %v397 = vand.u32 %v396, 4294901760
        %398 = vmatmul.mubr.f32.gmra.mrb[0].mxu0 %v397
        %v399 = vpop.f32.mrb[0].mxu0
        %v400 = vadd.f32 0.0, %v399
        %v401 = vpop.f32.mrb[0].mxu0
        %402 = vmatprep.mubr.f32.mxu0 0.0
        %v403 = vand.u32 %v203, 4294901760
        %v404 = vsub.f32 %v203, %v403
        %v405 = vand.u32 %v404, 4294901760
        %v406 = vsub.f32 %v404, %v405
        %v407 = vand.u32 %v406, 4294901760
        %408 = vmatmul.mubr.f32.gmra.mrb[0].mxu0 %v407
        %v409 = vpop.f32.mrb[0].mxu0
        %v410 = vadd.f32 0.0, %v409
        %v411 = vpop.f32.mrb[0].mxu0
        %412 = vmatprep.mubr.f32.mxu0 0.0
        %v413 = vand.u32 %v206, 4294901760
        %v414 = vsub.f32 %v206, %v413
        %v415 = vand.u32 %v414, 4294901760
        %v416 = vsub.f32 %v414, %v415
        %v417 = vand.u32 %v416, 4294901760
        %418 = vmatmul.mubr.f32.gmra.mrb[0].mxu0 %v417
        %v419 = vpop.f32.mrb[0].mxu0
        %v420 = vadd.f32 0.0, %v419
        %v421 = vpop.f32.mrb[0].mxu0
        %422 = vmatprep.mubr.f32.mxu0 0.0
        %v423 = vand.u32 %v209, 4294901760
        %v424 = vsub.f32 %v209, %v423
        %v425 = vand.u32 %v424, 4294901760
        %v426 = vsub.f32 %v424, %v425
        %v427 = vand.u32 %v426, 4294901760
        %428 = vmatmul.mubr.f32.gmra.mrb[0].mxu0 %v427
        %v429 = vpop.f32.mrb[0].mxu0
        %v430 = vadd.f32 0.0, %v429
        %v431 = vpop.f32.mrb[0].mxu0
        %432 = vmatprep.mubr.f32.mxu0 0.0
        %v433 = vand.u32 %v212, 4294901760
        %v434 = vsub.f32 %v212, %v433
        %v435 = vand.u32 %v434, 4294901760
        %v436 = vsub.f32 %v434, %v435
        %v437 = vand.u32 %v436, 4294901760
        %438 = vmatmul.mubr.f32.gmra.mrb[0].mxu0 %v437
        %v439 = vpop.f32.mrb[0].mxu0
        %v440 = vadd.f32 0.0, %v439
        %v441 = vpop.f32.mrb[0].mxu0
        %442 = vdwg.mxu0
        %443 = vmatprep.subr.mxu0 0.0
        %v444 = vand.u32 %v161, 4294901760
        %v445 = vsub.f32 %v161, %v444
        %v446 = vand.u32 %v445, 4294901760
        %v447 = vsub.f32 %v445, %v446
        %v448 = vand.u32 %v447, 4294901760
        %449 = vmatpush1.msra.mxu0 %v448
        %450 = vmatprep.subr.mxu0 0.0
        %v451 = vand.u32 %v162, 4294901760
        %v452 = vsub.f32 %v162, %v451
        %v453 = vand.u32 %v452, 4294901760
        %v454 = vsub.f32 %v452, %v453
        %v455 = vand.u32 %v454, 4294901760
        %456 = vmatpush1.msra.mxu0 %v455
        %457 = vmatprep.subr.mxu0 0.0
        %v458 = vand.u32 %v163, 4294901760
        %v459 = vsub.f32 %v163, %v458
        %v460 = vand.u32 %v459, 4294901760
        %v461 = vsub.f32 %v459, %v460
        %v462 = vand.u32 %v461, 4294901760
        %463 = vmatpush1.msra.mxu0 %v462
        %464 = vmatprep.subr.mxu0 0.0
        %v465 = vand.u32 %v164, 4294901760
        %v466 = vsub.f32 %v164, %v465
        %v467 = vand.u32 %v466, 4294901760
        %v468 = vsub.f32 %v466, %v467
        %v469 = vand.u32 %v468, 4294901760
        %470 = vmatpush1.msra.mxu0 %v469
        %471 = vmatprep.subr.mxu0 0.0
        %472 = vmatpush1.msra.mxu0 0.0
        %473 = vmatprep.subr.mxu0 0.0
        %474 = vmatpush1.msra.mxu0 0.0
        %475 = vmatprep.subr.mxu0 0.0
        %476 = vmatpush1.msra.mxu0 0.0
        %477 = vmatprep.subr.mxu0 0.0
        %478 = vmatpush1.msra.mxu0 0.0
        %479 = vmatprep.subr.mxu0 0.0
        %480 = vmatpush1.msra.mxu0 0.0
        %481 = vmatprep.subr.mxu0 0.0
        %482 = vmatpush1.msra.mxu0 0.0
        %483 = vmatprep.subr.mxu0 0.0
        %484 = vmatpush1.msra.mxu0 0.0
        %485 = vmatprep.subr.mxu0 0.0
        %486 = vmatpush1.msra.mxu0 0.0
        %487 = vmatprep.subr.mxu0 0.0
        %488 = vmatpush1.msra.mxu0 0.0
        %489 = vmatprep.subr.mxu0 0.0
        %490 = vmatpush1.msra.mxu0 0.0
        %491 = vmatprep.subr.mxu0 0.0
        %492 = vmatpush1.msra.mxu0 0.0
        %493 = vmatprep.subr.mxu0 0.0
        %494 = vmatpush1.msra.mxu0 0.0
        %495 = vmatprep.subr.mxu0 0.0
        %496 = vmatpush1.msra.mxu0 0.0
        %497 = vmatprep.subr.mxu0 0.0
        %498 = vmatpush1.msra.mxu0 0.0
        %499 = vmatprep.subr.mxu0 0.0
        %500 = vmatpush1.msra.mxu0 0.0
        %501 = vmatprep.subr.mxu0 0.0
        %502 = vmatpush1.msra.mxu0 0.0
        %503 = vmatprep.subr.mxu0 0.0
        %504 = vmatpush1.msra.mxu0 0.0
        %505 = vmatprep.subr.mxu0 0.0
        %506 = vmatpush1.msra.mxu0 0.0
        %507 = vmatprep.subr.mxu0 0.0
        %508 = vmatpush1.msra.mxu0 0.0
        %509 = vmatprep.subr.mxu0 0.0
        %510 = vmatpush1.msra.mxu0 0.0
        %511 = vmatprep.subr.mxu0 0.0
        %512 = vmatpush1.msra.mxu0 0.0
        %513 = vmatprep.subr.mxu0 0.0
        %514 = vmatpush1.msra.mxu0 0.0
        %515 = vmatprep.subr.mxu0 0.0
        %516 = vmatpush1.msra.mxu0 0.0
        %517 = vmatprep.subr.mxu0 0.0
        %518 = vmatpush1.msra.mxu0 0.0
        %519 = vmatprep.subr.mxu0 0.0
        %520 = vmatpush1.msra.mxu0 0.0
        %521 = vmatprep.subr.mxu0 0.0
        %522 = vmatpush1.msra.mxu0 0.0
        %523 = vmatprep.subr.mxu0 0.0
        %524 = vmatpush1.msra.mxu0 0.0
        %525 = vmatprep.subr.mxu0 0.0
        %526 = vmatpush1.msra.mxu0 0.0
        %527 = vmatprep.mubr.f32.mxu0 0.0
        %v528 = vand.u32 %v167, 4294901760
        %529 = vmatmul.mubr.f32.gmra.mrb[0].mxu0 %v528
        %v530 = vpop.f32.mrb[0].mxu0
        %v531 = vadd.f32 %v290, %v530
        %v532 = vpop.f32.mrb[0].mxu0
        %533 = vmatprep.mubr.f32.mxu0 0.0
        %v534 = vand.u32 %v170, 4294901760
        %535 = vmatmul.mubr.f32.gmra.mrb[0].mxu0 %v534
        %v536 = vpop.f32.mrb[0].mxu0
        %v537 = vadd.f32 %v300, %v536
        %v538 = vpop.f32.mrb[0].mxu0
        %539 = vmatprep.mubr.f32.mxu0 0.0
        %v540 = vand.u32 %v173, 4294901760
        %541 = vmatmul.mubr.f32.gmra.mrb[0].mxu0 %v540
        %v542 = vpop.f32.mrb[0].mxu0
        %v543 = vadd.f32 %v310, %v542
        %v544 = vpop.f32.mrb[0].mxu0
        %545 = vmatprep.mubr.f32.mxu0 0.0
        %v546 = vand.u32 %v176, 4294901760
        %547 = vmatmul.mubr.f32.gmra.mrb[0].mxu0 %v546
        %v548 = vpop.f32.mrb[0].mxu0
        %v549 = vadd.f32 %v320, %v548
        %v550 = vpop.f32.mrb[0].mxu0
        %551 = vmatprep.mubr.f32.mxu0 0.0
        %v552 = vand.u32 %v179, 4294901760
        %553 = vmatmul.mubr.f32.gmra.mrb[0].mxu0 %v552
        %v554 = vpop.f32.mrb[0].mxu0
        %v555 = vadd.f32 %v330, %v554
        %v556 = vpop.f32.mrb[0].mxu0
        %557 = vmatprep.mubr.f32.mxu0 0.0
        %v558 = vand.u32 %v182, 4294901760
        %559 = vmatmul.mubr.f32.gmra.mrb[0].mxu0 %v558
        %v560 = vpop.f32.mrb[0].mxu0
        %v561 = vadd.f32 %v340, %v560
        %v562 = vpop.f32.mrb[0].mxu0
        %563 = vmatprep.mubr.f32.mxu0 0.0
        %v564 = vand.u32 %v185, 4294901760
        %565 = vmatmul.mubr.f32.gmra.mrb[0].mxu0 %v564
        %v566 = vpop.f32.mrb[0].mxu0
        %v567 = vadd.f32 %v350, %v566
        %v568 = vpop.f32.mrb[0].mxu0
        %569 = vmatprep.mubr.f32.mxu0 0.0
        %v570 = vand.u32 %v188, 4294901760
        %571 = vmatmul.mubr.f32.gmra.mrb[0].mxu0 %v570
        %v572 = vpop.f32.mrb[0].mxu0
        %v573 = vadd.f32 %v360, %v572
        %v574 = vpop.f32.mrb[0].mxu0
        %575 = vmatprep.mubr.f32.mxu0 0.0
        %v576 = vand.u32 %v191, 4294901760
        %577 = vmatmul.mubr.f32.gmra.mrb[0].mxu0 %v576
        %v578 = vpop.f32.mrb[0].mxu0
        %v579 = vadd.f32 %v370, %v578
        %v580 = vpop.f32.mrb[0].mxu0
        %581 = vmatprep.mubr.f32.mxu0 0.0
        %v582 = vand.u32 %v194, 4294901760
        %583 = vmatmul.mubr.f32.gmra.mrb[0].mxu0 %v582
        %v584 = vpop.f32.mrb[0].mxu0
        %v585 = vadd.f32 %v380, %v584
        %v586 = vpop.f32.mrb[0].mxu0
        %587 = vmatprep.mubr.f32.mxu0 0.0
        %v588 = vand.u32 %v197, 4294901760
        %589 = vmatmul.mubr.f32.gmra.mrb[0].mxu0 %v588
        %v590 = vpop.f32.mrb[0].mxu0
        %v591 = vadd.f32 %v390, %v590
        %v592 = vpop.f32.mrb[0].mxu0
        %593 = vmatprep.mubr.f32.mxu0 0.0
        %v594 = vand.u32 %v200, 4294901760
        %595 = vmatmul.mubr.f32.gmra.mrb[0].mxu0 %v594
        %v596 = vpop.f32.mrb[0].mxu0
        %v597 = vadd.f32 %v400, %v596
        %v598 = vpop.f32.mrb[0].mxu0
        %599 = vmatprep.mubr.f32.mxu0 0.0
        %v600 = vand.u32 %v203, 4294901760
        %601 = vmatmul.mubr.f32.gmra.mrb[0].mxu0 %v600
        %v602 = vpop.f32.mrb[0].mxu0
        %v603 = vadd.f32 %v410, %v602
        %v604 = vpop.f32.mrb[0].mxu0
        %605 = vmatprep.mubr.f32.mxu0 0.0
        %v606 = vand.u32 %v206, 4294901760
        %607 = vmatmul.mubr.f32.gmra.mrb[0].mxu0 %v606
        %v608 = vpop.f32.mrb[0].mxu0
        %v609 = vadd.f32 %v420, %v608
        %v610 = vpop.f32.mrb[0].mxu0
        %611 = vmatprep.mubr.f32.mxu0 0.0
        %v612 = vand.u32 %v209, 4294901760
        %613 = vmatmul.mubr.f32.gmra.mrb[0].mxu0 %v612
        %v614 = vpop.f32.mrb[0].mxu0
        %v615 = vadd.f32 %v430, %v614
        %v616 = vpop.f32.mrb[0].mxu0
        %617 = vmatprep.mubr.f32.mxu0 0.0
        %v618 = vand.u32 %v212, 4294901760
        %619 = vmatmul.mubr.f32.gmra.mrb[0].mxu0 %v618
        %v620 = vpop.f32.mrb[0].mxu0
        %v621 = vadd.f32 %v440, %v620
        %v622 = vpop.f32.mrb[0].mxu0
        %623 = vdwg.mxu0
        %624 = vmatprep.subr.mxu0 0.0
        %v625 = vand.u32 %v161, 4294901760
        %v626 = vsub.f32 %v161, %v625
        %627 = vmatpush1.msra.mxu0 %v626
        %628 = vmatprep.subr.mxu0 0.0
        %v629 = vand.u32 %v162, 4294901760
        %v630 = vsub.f32 %v162, %v629
        %631 = vmatpush1.msra.mxu0 %v630
        %632 = vmatprep.subr.mxu0 0.0
        %v633 = vand.u32 %v163, 4294901760
        %v634 = vsub.f32 %v163, %v633
        %635 = vmatpush1.msra.mxu0 %v634
        %636 = vmatprep.subr.mxu0 0.0
        %v637 = vand.u32 %v164, 4294901760
        %v638 = vsub.f32 %v164, %v637
        %639 = vmatpush1.msra.mxu0 %v638
        %640 = vmatprep.subr.mxu0 0.0
        %641 = vmatpush1.msra.mxu0 0.0
        %642 = vmatprep.subr.mxu0 0.0
        %643 = vmatpush1.msra.mxu0 0.0
        %644 = vmatprep.subr.mxu0 0.0
        %645 = vmatpush1.msra.mxu0 0.0
        %646 = vmatprep.subr.mxu0 0.0
        %647 = vmatpush1.msra.mxu0 0.0
        %648 = vmatprep.subr.mxu0 0.0
        %649 = vmatpush1.msra.mxu0 0.0
        %650 = vmatprep.subr.mxu0 0.0
        %651 = vmatpush1.msra.mxu0 0.0
        %652 = vmatprep.subr.mxu0 0.0
        %653 = vmatpush1.msra.mxu0 0.0
        %654 = vmatprep.subr.mxu0 0.0
        %655 = vmatpush1.msra.mxu0 0.0
        %656 = vmatprep.subr.mxu0 0.0
        %657 = vmatpush1.msra.mxu0 0.0
        %658 = vmatprep.subr.mxu0 0.0
        %659 = vmatpush1.msra.mxu0 0.0
        %660 = vmatprep.subr.mxu0 0.0
        %661 = vmatpush1.msra.mxu0 0.0
        %662 = vmatprep.subr.mxu0 0.0
        %663 = vmatpush1.msra.mxu0 0.0
        %664 = vmatprep.subr.mxu0 0.0
        %665 = vmatpush1.msra.mxu0 0.0
        %666 = vmatprep.subr.mxu0 0.0
        %667 = vmatpush1.msra.mxu0 0.0
        %668 = vmatprep.subr.mxu0 0.0
        %669 = vmatpush1.msra.mxu0 0.0
        %670 = vmatprep.subr.mxu0 0.0
        %671 = vmatpush1.msra.mxu0 0.0
        %672 = vmatprep.subr.mxu0 0.0
        %673 = vmatpush1.msra.mxu0 0.0
        %674 = vmatprep.subr.mxu0 0.0
        %675 = vmatpush1.msra.mxu0 0.0
        %676 = vmatprep.subr.mxu0 0.0
        %677 = vmatpush1.msra.mxu0 0.0
        %678 = vmatprep.subr.mxu0 0.0
        %679 = vmatpush1.msra.mxu0 0.0
        %680 = vmatprep.subr.mxu0 0.0
        %681 = vmatpush1.msra.mxu0 0.0
        %682 = vmatprep.subr.mxu0 0.0
        %683 = vmatpush1.msra.mxu0 0.0
        %684 = vmatprep.subr.mxu0 0.0
        %685 = vmatpush1.msra.mxu0 0.0
        %686 = vmatprep.subr.mxu0 0.0
        %687 = vmatpush1.msra.mxu0 0.0
        %688 = vmatprep.subr.mxu0 0.0
        %689 = vmatpush1.msra.mxu0 0.0
        %690 = vmatprep.subr.mxu0 0.0
        %691 = vmatpush1.msra.mxu0 0.0
        %692 = vmatprep.subr.mxu0 0.0
        %693 = vmatpush1.msra.mxu0 0.0
        %694 = vmatprep.subr.mxu0 0.0
        %695 = vmatpush1.msra.mxu0 0.0
        %696 = vmatprep.mubr.f32.mxu0 0.0
        %v697 = vand.u32 %v167, 4294901760
        %v698 = vsub.f32 %v167, %v697
        %699 = vmatmul.mubr.f32.gmra.mrb[0].mxu0 %v698
        %v700 = vpop.f32.mrb[0].mxu0
        %v701 = vadd.f32 %v531, %v700
        %v702 = vpop.f32.mrb[0].mxu0
        %703 = vmatprep.mubr.f32.mxu0 0.0
        %v704 = vand.u32 %v170, 4294901760
        %v705 = vsub.f32 %v170, %v704
        %706 = vmatmul.mubr.f32.gmra.mrb[0].mxu0 %v705
        %v707 = vpop.f32.mrb[0].mxu0
        %v708 = vadd.f32 %v537, %v707
        %v709 = vpop.f32.mrb[0].mxu0
        %710 = vmatprep.mubr.f32.mxu0 0.0
        %v711 = vand.u32 %v173, 4294901760
        %v712 = vsub.f32 %v173, %v711
        %713 = vmatmul.mubr.f32.gmra.mrb[0].mxu0 %v712
        %v714 = vpop.f32.mrb[0].mxu0
        %v715 = vadd.f32 %v543, %v714
        %v716 = vpop.f32.mrb[0].mxu0
        %717 = vmatprep.mubr.f32.mxu0 0.0
        %v718 = vand.u32 %v176, 4294901760
        %v719 = vsub.f32 %v176, %v718
        %720 = vmatmul.mubr.f32.gmra.mrb[0].mxu0 %v719
        %v721 = vpop.f32.mrb[0].mxu0
        %v722 = vadd.f32 %v549, %v721
        %v723 = vpop.f32.mrb[0].mxu0
        %724 = vmatprep.mubr.f32.mxu0 0.0
        %v725 = vand.u32 %v179, 4294901760
        %v726 = vsub.f32 %v179, %v725
        %727 = vmatmul.mubr.f32.gmra.mrb[0].mxu0 %v726
        %v728 = vpop.f32.mrb[0].mxu0
        %v729 = vadd.f32 %v555, %v728
        %v730 = vpop.f32.mrb[0].mxu0
        %731 = vmatprep.mubr.f32.mxu0 0.0
        %v732 = vand.u32 %v182, 4294901760
        %v733 = vsub.f32 %v182, %v732
        %734 = vmatmul.mubr.f32.gmra.mrb[0].mxu0 %v733
        %v735 = vpop.f32.mrb[0].mxu0
        %v736 = vadd.f32 %v561, %v735
        %v737 = vpop.f32.mrb[0].mxu0
        %738 = vmatprep.mubr.f32.mxu0 0.0
        %v739 = vand.u32 %v185, 4294901760
        %v740 = vsub.f32 %v185, %v739
        %741 = vmatmul.mubr.f32.gmra.mrb[0].mxu0 %v740
        %v742 = vpop.f32.mrb[0].mxu0
        %v743 = vadd.f32 %v567, %v742
        %v744 = vpop.f32.mrb[0].mxu0
        %745 = vmatprep.mubr.f32.mxu0 0.0
        %v746 = vand.u32 %v188, 4294901760
        %v747 = vsub.f32 %v188, %v746
        %748 = vmatmul.mubr.f32.gmra.mrb[0].mxu0 %v747
        %v749 = vpop.f32.mrb[0].mxu0
        %v750 = vadd.f32 %v573, %v749
        %v751 = vpop.f32.mrb[0].mxu0
        %752 = vmatprep.mubr.f32.mxu0 0.0
        %v753 = vand.u32 %v191, 4294901760
        %v754 = vsub.f32 %v191, %v753
        %755 = vmatmul.mubr.f32.gmra.mrb[0].mxu0 %v754
        %v756 = vpop.f32.mrb[0].mxu0
        %v757 = vadd.f32 %v579, %v756
        %v758 = vpop.f32.mrb[0].mxu0
        %759 = vmatprep.mubr.f32.mxu0 0.0
        %v760 = vand.u32 %v194, 4294901760
        %v761 = vsub.f32 %v194, %v760
        %762 = vmatmul.mubr.f32.gmra.mrb[0].mxu0 %v761
        %v763 = vpop.f32.mrb[0].mxu0
        %v764 = vadd.f32 %v585, %v763
        %v765 = vpop.f32.mrb[0].mxu0
        %766 = vmatprep.mubr.f32.mxu0 0.0
        %v767 = vand.u32 %v197, 4294901760
        %v768 = vsub.f32 %v197, %v767
        %769 = vmatmul.mubr.f32.gmra.mrb[0].mxu0 %v768
        %v770 = vpop.f32.mrb[0].mxu0
        %v771 = vadd.f32 %v591, %v770
        %v772 = vpop.f32.mrb[0].mxu0
        %773 = vmatprep.mubr.f32.mxu0 0.0
        %v774 = vand.u32 %v200, 4294901760
        %v775 = vsub.f32 %v200, %v774
        %776 = vmatmul.mubr.f32.gmra.mrb[0].mxu0 %v775
        %v777 = vpop.f32.mrb[0].mxu0
        %v778 = vadd.f32 %v597, %v777
        %v779 = vpop.f32.mrb[0].mxu0
        %780 = vmatprep.mubr.f32.mxu0 0.0
        %v781 = vand.u32 %v203, 4294901760
        %v782 = vsub.f32 %v203, %v781
        %783 = vmatmul.mubr.f32.gmra.mrb[0].mxu0 %v782
        %v784 = vpop.f32.mrb[0].mxu0
        %v785 = vadd.f32 %v603, %v784
        %v786 = vpop.f32.mrb[0].mxu0
        %787 = vmatprep.mubr.f32.mxu0 0.0
        %v788 = vand.u32 %v206, 4294901760
        %v789 = vsub.f32 %v206, %v788
        %790 = vmatmul.mubr.f32.gmra.mrb[0].mxu0 %v789
        %v791 = vpop.f32.mrb[0].mxu0
        %v792 = vadd.f32 %v609, %v791
        %v793 = vpop.f32.mrb[0].mxu0
        %794 = vmatprep.mubr.f32.mxu0 0.0
        %v795 = vand.u32 %v209, 4294901760
        %v796 = vsub.f32 %v209, %v795
        %797 = vmatmul.mubr.f32.gmra.mrb[0].mxu0 %v796
        %v798 = vpop.f32.mrb[0].mxu0
        %v799 = vadd.f32 %v615, %v798
        %v800 = vpop.f32.mrb[0].mxu0
        %801 = vmatprep.mubr.f32.mxu0 0.0
        %v802 = vand.u32 %v212, 4294901760
        %v803 = vsub.f32 %v212, %v802
        %804 = vmatmul.mubr.f32.gmra.mrb[0].mxu0 %v803
        %v805 = vpop.f32.mrb[0].mxu0
        %v806 = vadd.f32 %v621, %v805
        %v807 = vpop.f32.mrb[0].mxu0
        %808 = vdwg.mxu0
        %809 = vmatprep.subr.mxu0 0.0
        %v810 = vand.u32 %v161, 4294901760
        %811 = vmatpush1.msra.mxu0 %v810
        %812 = vmatprep.subr.mxu0 0.0
        %v813 = vand.u32 %v162, 4294901760
        %814 = vmatpush1.msra.mxu0 %v813
        %815 = vmatprep.subr.mxu0 0.0
        %v816 = vand.u32 %v163, 4294901760
        %817 = vmatpush1.msra.mxu0 %v816
        %818 = vmatprep.subr.mxu0 0.0
        %v819 = vand.u32 %v164, 4294901760
        %820 = vmatpush1.msra.mxu0 %v819
        %821 = vmatprep.subr.mxu0 0.0
        %822 = vmatpush1.msra.mxu0 0.0
        %823 = vmatprep.subr.mxu0 0.0
        %824 = vmatpush1.msra.mxu0 0.0
        %825 = vmatprep.subr.mxu0 0.0
        %826 = vmatpush1.msra.mxu0 0.0
        %827 = vmatprep.subr.mxu0 0.0
        %828 = vmatpush1.msra.mxu0 0.0
        %829 = vmatprep.subr.mxu0 0.0
        %830 = vmatpush1.msra.mxu0 0.0
        %831 = vmatprep.subr.mxu0 0.0
        %832 = vmatpush1.msra.mxu0 0.0
        %833 = vmatprep.subr.mxu0 0.0
        %834 = vmatpush1.msra.mxu0 0.0
        %835 = vmatprep.subr.mxu0 0.0
        %836 = vmatpush1.msra.mxu0 0.0
        %837 = vmatprep.subr.mxu0 0.0
        %838 = vmatpush1.msra.mxu0 0.0
        %839 = vmatprep.subr.mxu0 0.0
        %840 = vmatpush1.msra.mxu0 0.0
        %841 = vmatprep.subr.mxu0 0.0
        %842 = vmatpush1.msra.mxu0 0.0
        %843 = vmatprep.subr.mxu0 0.0
        %844 = vmatpush1.msra.mxu0 0.0
        %845 = vmatprep.subr.mxu0 0.0
        %846 = vmatpush1.msra.mxu0 0.0
        %847 = vmatprep.subr.mxu0 0.0
        %848 = vmatpush1.msra.mxu0 0.0
        %849 = vmatprep.subr.mxu0 0.0
        %850 = vmatpush1.msra.mxu0 0.0
        %851 = vmatprep.subr.mxu0 0.0
        %852 = vmatpush1.msra.mxu0 0.0
        %853 = vmatprep.subr.mxu0 0.0
        %854 = vmatpush1.msra.mxu0 0.0
        %855 = vmatprep.subr.mxu0 0.0
        %856 = vmatpush1.msra.mxu0 0.0
        %857 = vmatprep.subr.mxu0 0.0
        %858 = vmatpush1.msra.mxu0 0.0
        %859 = vmatprep.subr.mxu0 0.0
        %860 = vmatpush1.msra.mxu0 0.0
        %861 = vmatprep.subr.mxu0 0.0
        %862 = vmatpush1.msra.mxu0 0.0
        %863 = vmatprep.subr.mxu0 0.0
        %864 = vmatpush1.msra.mxu0 0.0
        %865 = vmatprep.subr.mxu0 0.0
        %866 = vmatpush1.msra.mxu0 0.0
        %867 = vmatprep.subr.mxu0 0.0
        %868 = vmatpush1.msra.mxu0 0.0
        %869 = vmatprep.subr.mxu0 0.0
        %870 = vmatpush1.msra.mxu0 0.0
        %871 = vmatprep.subr.mxu0 0.0
        %872 = vmatpush1.msra.mxu0 0.0
        %873 = vmatprep.subr.mxu0 0.0
        %874 = vmatpush1.msra.mxu0 0.0
        %875 = vmatprep.subr.mxu0 0.0
        %876 = vmatpush1.msra.mxu0 0.0
        %877 = vmatprep.mubr.f32.mxu0 0.0
        %v878 = vand.u32 %v167, 4294901760
        %v879 = vsub.f32 %v167, %v878
        %v880 = vand.u32 %v879, 4294901760
        %881 = vmatmul.mubr.f32.gmra.mrb[0].mxu0 %v880
        %v882 = vpop.f32.mrb[0].mxu0
        %v883 = vadd.f32 %v701, %v882
        %v884 = vpop.f32.mrb[0].mxu0
        %885 = vmatprep.mubr.f32.mxu0 0.0
        %v886 = vand.u32 %v170, 4294901760
        %v887 = vsub.f32 %v170, %v886
        %v888 = vand.u32 %v887, 4294901760
        %889 = vmatmul.mubr.f32.gmra.mrb[0].mxu0 %v888
        %v890 = vpop.f32.mrb[0].mxu0
        %v891 = vadd.f32 %v708, %v890
        %v892 = vpop.f32.mrb[0].mxu0
        %893 = vmatprep.mubr.f32.mxu0 0.0
        %v894 = vand.u32 %v173, 4294901760
        %v895 = vsub.f32 %v173, %v894
        %v896 = vand.u32 %v895, 4294901760
        %897 = vmatmul.mubr.f32.gmra.mrb[0].mxu0 %v896
        %v898 = vpop.f32.mrb[0].mxu0
        %v899 = vadd.f32 %v715, %v898
        %v900 = vpop.f32.mrb[0].mxu0
        %901 = vmatprep.mubr.f32.mxu0 0.0
        %v902 = vand.u32 %v176, 4294901760
        %v903 = vsub.f32 %v176, %v902
        %v904 = vand.u32 %v903, 4294901760
        %905 = vmatmul.mubr.f32.gmra.mrb[0].mxu0 %v904
        %v906 = vpop.f32.mrb[0].mxu0
        %v907 = vadd.f32 %v722, %v906
        %v908 = vpop.f32.mrb[0].mxu0
        %909 = vmatprep.mubr.f32.mxu0 0.0
        %v910 = vand.u32 %v179, 4294901760
        %v911 = vsub.f32 %v179, %v910
        %v912 = vand.u32 %v911, 4294901760
        %913 = vmatmul.mubr.f32.gmra.mrb[0].mxu0 %v912
        %v914 = vpop.f32.mrb[0].mxu0
        %v915 = vadd.f32 %v729, %v914
        %v916 = vpop.f32.mrb[0].mxu0
        %917 = vmatprep.mubr.f32.mxu0 0.0
        %v918 = vand.u32 %v182, 4294901760
        %v919 = vsub.f32 %v182, %v918
        %v920 = vand.u32 %v919, 4294901760
        %921 = vmatmul.mubr.f32.gmra.mrb[0].mxu0 %v920
        %v922 = vpop.f32.mrb[0].mxu0
        %v923 = vadd.f32 %v736, %v922
        %v924 = vpop.f32.mrb[0].mxu0
        %925 = vmatprep.mubr.f32.mxu0 0.0
        %v926 = vand.u32 %v185, 4294901760
        %v927 = vsub.f32 %v185, %v926
        %v928 = vand.u32 %v927, 4294901760
        %929 = vmatmul.mubr.f32.gmra.mrb[0].mxu0 %v928
        %v930 = vpop.f32.mrb[0].mxu0
        %v931 = vadd.f32 %v743, %v930
        %v932 = vpop.f32.mrb[0].mxu0
        %933 = vmatprep.mubr.f32.mxu0 0.0
        %v934 = vand.u32 %v188, 4294901760
        %v935 = vsub.f32 %v188, %v934
        %v936 = vand.u32 %v935, 4294901760
        %937 = vmatmul.mubr.f32.gmra.mrb[0].mxu0 %v936
        %v938 = vpop.f32.mrb[0].mxu0
        %v939 = vadd.f32 %v750, %v938
        %v940 = vpop.f32.mrb[0].mxu0
        %941 = vmatprep.mubr.f32.mxu0 0.0
        %v942 = vand.u32 %v191, 4294901760
        %v943 = vsub.f32 %v191, %v942
        %v944 = vand.u32 %v943, 4294901760
        %945 = vmatmul.mubr.f32.gmra.mrb[0].mxu0 %v944
        %v946 = vpop.f32.mrb[0].mxu0
        %v947 = vadd.f32 %v757, %v946
        %v948 = vpop.f32.mrb[0].mxu0
        %949 = vmatprep.mubr.f32.mxu0 0.0
        %v950 = vand.u32 %v194, 4294901760
        %v951 = vsub.f32 %v194, %v950
        %v952 = vand.u32 %v951, 4294901760
        %953 = vmatmul.mubr.f32.gmra.mrb[0].mxu0 %v952
        %v954 = vpop.f32.mrb[0].mxu0
        %v955 = vadd.f32 %v764, %v954
        %v956 = vpop.f32.mrb[0].mxu0
        %957 = vmatprep.mubr.f32.mxu0 0.0
        %v958 = vand.u32 %v197, 4294901760
        %v959 = vsub.f32 %v197, %v958
        %v960 = vand.u32 %v959, 4294901760
        %961 = vmatmul.mubr.f32.gmra.mrb[0].mxu0 %v960
        %v962 = vpop.f32.mrb[0].mxu0
        %v963 = vadd.f32 %v771, %v962
        %v964 = vpop.f32.mrb[0].mxu0
        %965 = vmatprep.mubr.f32.mxu0 0.0
        %v966 = vand.u32 %v200, 4294901760
        %v967 = vsub.f32 %v200, %v966
        %v968 = vand.u32 %v967, 4294901760
        %969 = vmatmul.mubr.f32.gmra.mrb[0].mxu0 %v968
        %v970 = vpop.f32.mrb[0].mxu0
        %v971 = vadd.f32 %v778, %v970
        %v972 = vpop.f32.mrb[0].mxu0
        %973 = vmatprep.mubr.f32.mxu0 0.0
        %v974 = vand.u32 %v203, 4294901760
        %v975 = vsub.f32 %v203, %v974
        %v976 = vand.u32 %v975, 4294901760
        %977 = vmatmul.mubr.f32.gmra.mrb[0].mxu0 %v976
        %v978 = vpop.f32.mrb[0].mxu0
        %v979 = vadd.f32 %v785, %v978
        %v980 = vpop.f32.mrb[0].mxu0
        %981 = vmatprep.mubr.f32.mxu0 0.0
        %v982 = vand.u32 %v206, 4294901760
        %v983 = vsub.f32 %v206, %v982
        %v984 = vand.u32 %v983, 4294901760
        %985 = vmatmul.mubr.f32.gmra.mrb[0].mxu0 %v984
        %v986 = vpop.f32.mrb[0].mxu0
        %v987 = vadd.f32 %v792, %v986
        %v988 = vpop.f32.mrb[0].mxu0
        %989 = vmatprep.mubr.f32.mxu0 0.0
        %v990 = vand.u32 %v209, 4294901760
        %v991 = vsub.f32 %v209, %v990
        %v992 = vand.u32 %v991, 4294901760
        %993 = vmatmul.mubr.f32.gmra.mrb[0].mxu0 %v992
        %v994 = vpop.f32.mrb[0].mxu0
        %v995 = vadd.f32 %v799, %v994
        %v996 = vpop.f32.mrb[0].mxu0
        %997 = vmatprep.mubr.f32.mxu0 0.0
        %v998 = vand.u32 %v212, 4294901760
        %v999 = vsub.f32 %v212, %v998
        %v1000 = vand.u32 %v999, 4294901760
        %1001 = vmatmul.mubr.f32.gmra.mrb[0].mxu0 %v1000
        %v1002 = vpop.f32.mrb[0].mxu0
        %v1003 = vadd.f32 %v806, %v1002
        %v1004 = vpop.f32.mrb[0].mxu0
        %1005 = vdwg.mxu0
        %1006 = vmatprep.subr.mxu0 0.0
        %v1007 = vand.u32 %v161, 4294901760
        %v1008 = vsub.f32 %v161, %v1007
        %v1009 = vand.u32 %v1008, 4294901760
        %1010 = vmatpush1.msra.mxu0 %v1009
        %1011 = vmatprep.subr.mxu0 0.0
        %v1012 = vand.u32 %v162, 4294901760
        %v1013 = vsub.f32 %v162, %v1012
        %v1014 = vand.u32 %v1013, 4294901760
        %1015 = vmatpush1.msra.mxu0 %v1014
        %1016 = vmatprep.subr.mxu0 0.0
        %v1017 = vand.u32 %v163, 4294901760
        %v1018 = vsub.f32 %v163, %v1017
        %v1019 = vand.u32 %v1018, 4294901760
        %1020 = vmatpush1.msra.mxu0 %v1019
        %1021 = vmatprep.subr.mxu0 0.0
        %v1022 = vand.u32 %v164, 4294901760
        %v1023 = vsub.f32 %v164, %v1022
        %v1024 = vand.u32 %v1023, 4294901760
        %1025 = vmatpush1.msra.mxu0 %v1024
        %1026 = vmatprep.subr.mxu0 0.0
        %1027 = vmatpush1.msra.mxu0 0.0
        %1028 = vmatprep.subr.mxu0 0.0
        %1029 = vmatpush1.msra.mxu0 0.0
        %1030 = vmatprep.subr.mxu0 0.0
        %1031 = vmatpush1.msra.mxu0 0.0
        %1032 = vmatprep.subr.mxu0 0.0
        %1033 = vmatpush1.msra.mxu0 0.0
        %1034 = vmatprep.subr.mxu0 0.0
        %1035 = vmatpush1.msra.mxu0 0.0
        %1036 = vmatprep.subr.mxu0 0.0
        %1037 = vmatpush1.msra.mxu0 0.0
        %1038 = vmatprep.subr.mxu0 0.0
        %1039 = vmatpush1.msra.mxu0 0.0
        %1040 = vmatprep.subr.mxu0 0.0
        %1041 = vmatpush1.msra.mxu0 0.0
        %1042 = vmatprep.subr.mxu0 0.0
        %1043 = vmatpush1.msra.mxu0 0.0
        %1044 = vmatprep.subr.mxu0 0.0
        %1045 = vmatpush1.msra.mxu0 0.0
        %1046 = vmatprep.subr.mxu0 0.0
        %1047 = vmatpush1.msra.mxu0 0.0
        %1048 = vmatprep.subr.mxu0 0.0
        %1049 = vmatpush1.msra.mxu0 0.0
        %1050 = vmatprep.subr.mxu0 0.0
        %1051 = vmatpush1.msra.mxu0 0.0
        %1052 = vmatprep.subr.mxu0 0.0
        %1053 = vmatpush1.msra.mxu0 0.0
        %1054 = vmatprep.subr.mxu0 0.0
        %1055 = vmatpush1.msra.mxu0 0.0
        %1056 = vmatprep.subr.mxu0 0.0
        %1057 = vmatpush1.msra.mxu0 0.0
        %1058 = vmatprep.subr.mxu0 0.0
        %1059 = vmatpush1.msra.mxu0 0.0
        %1060 = vmatprep.subr.mxu0 0.0
        %1061 = vmatpush1.msra.mxu0 0.0
        %1062 = vmatprep.subr.mxu0 0.0
        %1063 = vmatpush1.msra.mxu0 0.0
        %1064 = vmatprep.subr.mxu0 0.0
        %1065 = vmatpush1.msra.mxu0 0.0
        %1066 = vmatprep.subr.mxu0 0.0
        %1067 = vmatpush1.msra.mxu0 0.0
        %1068 = vmatprep.subr.mxu0 0.0
        %1069 = vmatpush1.msra.mxu0 0.0
        %1070 = vmatprep.subr.mxu0 0.0
        %1071 = vmatpush1.msra.mxu0 0.0
        %1072 = vmatprep.subr.mxu0 0.0
        %1073 = vmatpush1.msra.mxu0 0.0
        %1074 = vmatprep.subr.mxu0 0.0
        %1075 = vmatpush1.msra.mxu0 0.0
        %1076 = vmatprep.subr.mxu0 0.0
        %1077 = vmatpush1.msra.mxu0 0.0
        %1078 = vmatprep.subr.mxu0 0.0
        %1079 = vmatpush1.msra.mxu0 0.0
        %1080 = vmatprep.subr.mxu0 0.0
        %1081 = vmatpush1.msra.mxu0 0.0
        %1082 = vmatprep.mubr.f32.mxu0 0.0
        %v1083 = vand.u32 %v167, 4294901760
        %1084 = vmatmul.mubr.f32.gmra.mrb[0].mxu0 %v1083
        %v1085 = vpop.f32.mrb[0].mxu0
        %v1086 = vadd.f32 %v883, %v1085
        %v1087 = vpop.f32.mrb[0].mxu0
        %1088 = vmatprep.mubr.f32.mxu0 0.0
        %v1089 = vand.u32 %v170, 4294901760
        %1090 = vmatmul.mubr.f32.gmra.mrb[0].mxu0 %v1089
        %v1091 = vpop.f32.mrb[0].mxu0
        %v1092 = vadd.f32 %v891, %v1091
        %v1093 = vpop.f32.mrb[0].mxu0
        %1094 = vmatprep.mubr.f32.mxu0 0.0
        %v1095 = vand.u32 %v173, 4294901760
        %1096 = vmatmul.mubr.f32.gmra.mrb[0].mxu0 %v1095
        %v1097 = vpop.f32.mrb[0].mxu0
        %v1098 = vadd.f32 %v899, %v1097
        %v1099 = vpop.f32.mrb[0].mxu0
        %1100 = vmatprep.mubr.f32.mxu0 0.0
        %v1101 = vand.u32 %v176, 4294901760
        %1102 = vmatmul.mubr.f32.gmra.mrb[0].mxu0 %v1101
        %v1103 = vpop.f32.mrb[0].mxu0
        %v1104 = vadd.f32 %v907, %v1103
        %v1105 = vpop.f32.mrb[0].mxu0
        %1106 = vmatprep.mubr.f32.mxu0 0.0
        %v1107 = vand.u32 %v179, 4294901760
        %1108 = vmatmul.mubr.f32.gmra.mrb[0].mxu0 %v1107
        %v1109 = vpop.f32.mrb[0].mxu0
        %v1110 = vadd.f32 %v915, %v1109
        %v1111 = vpop.f32.mrb[0].mxu0
        %1112 = vmatprep.mubr.f32.mxu0 0.0
        %v1113 = vand.u32 %v182, 4294901760
        %1114 = vmatmul.mubr.f32.gmra.mrb[0].mxu0 %v1113
        %v1115 = vpop.f32.mrb[0].mxu0
        %v1116 = vadd.f32 %v923, %v1115
        %v1117 = vpop.f32.mrb[0].mxu0
        %1118 = vmatprep.mubr.f32.mxu0 0.0
        %v1119 = vand.u32 %v185, 4294901760
        %1120 = vmatmul.mubr.f32.gmra.mrb[0].mxu0 %v1119
        %v1121 = vpop.f32.mrb[0].mxu0
        %v1122 = vadd.f32 %v931, %v1121
        %v1123 = vpop.f32.mrb[0].mxu0
        %1124 = vmatprep.mubr.f32.mxu0 0.0
        %v1125 = vand.u32 %v188, 4294901760
        %1126 = vmatmul.mubr.f32.gmra.mrb[0].mxu0 %v1125
        %v1127 = vpop.f32.mrb[0].mxu0
        %v1128 = vadd.f32 %v939, %v1127
        %v1129 = vpop.f32.mrb[0].mxu0
        %1130 = vmatprep.mubr.f32.mxu0 0.0
        %v1131 = vand.u32 %v191, 4294901760
        %1132 = vmatmul.mubr.f32.gmra.mrb[0].mxu0 %v1131
        %v1133 = vpop.f32.mrb[0].mxu0
        %v1134 = vadd.f32 %v947, %v1133
        %v1135 = vpop.f32.mrb[0].mxu0
        %1136 = vmatprep.mubr.f32.mxu0 0.0
        %v1137 = vand.u32 %v194, 4294901760
        %1138 = vmatmul.mubr.f32.gmra.mrb[0].mxu0 %v1137
        %v1139 = vpop.f32.mrb[0].mxu0
        %v1140 = vadd.f32 %v955, %v1139
        %v1141 = vpop.f32.mrb[0].mxu0
        %1142 = vmatprep.mubr.f32.mxu0 0.0
        %v1143 = vand.u32 %v197, 4294901760
        %1144 = vmatmul.mubr.f32.gmra.mrb[0].mxu0 %v1143
        %v1145 = vpop.f32.mrb[0].mxu0
        %v1146 = vadd.f32 %v963, %v1145
        %v1147 = vpop.f32.mrb[0].mxu0
        %1148 = vmatprep.mubr.f32.mxu0 0.0
        %v1149 = vand.u32 %v200, 4294901760
        %1150 = vmatmul.mubr.f32.gmra.mrb[0].mxu0 %v1149
        %v1151 = vpop.f32.mrb[0].mxu0
        %v1152 = vadd.f32 %v971, %v1151
        %v1153 = vpop.f32.mrb[0].mxu0
        %1154 = vmatprep.mubr.f32.mxu0 0.0
        %v1155 = vand.u32 %v203, 4294901760
        %1156 = vmatmul.mubr.f32.gmra.mrb[0].mxu0 %v1155
        %v1157 = vpop.f32.mrb[0].mxu0
        %v1158 = vadd.f32 %v979, %v1157
        %v1159 = vpop.f32.mrb[0].mxu0
        %1160 = vmatprep.mubr.f32.mxu0 0.0
        %v1161 = vand.u32 %v206, 4294901760
        %1162 = vmatmul.mubr.f32.gmra.mrb[0].mxu0 %v1161
        %v1163 = vpop.f32.mrb[0].mxu0
        %v1164 = vadd.f32 %v987, %v1163
        %v1165 = vpop.f32.mrb[0].mxu0
        %1166 = vmatprep.mubr.f32.mxu0 0.0
        %v1167 = vand.u32 %v209, 4294901760
        %1168 = vmatmul.mubr.f32.gmra.mrb[0].mxu0 %v1167
        %v1169 = vpop.f32.mrb[0].mxu0
        %v1170 = vadd.f32 %v995, %v1169
        %v1171 = vpop.f32.mrb[0].mxu0
        %1172 = vmatprep.mubr.f32.mxu0 0.0
        %v1173 = vand.u32 %v212, 4294901760
        %1174 = vmatmul.mubr.f32.gmra.mrb[0].mxu0 %v1173
        %v1175 = vpop.f32.mrb[0].mxu0
        %v1176 = vadd.f32 %v1003, %v1175
        %v1177 = vpop.f32.mrb[0].mxu0
        %1178 = vdwg.mxu0
        %1179 = vmatprep.subr.mxu0 0.0
        %v1180 = vand.u32 %v161, 4294901760
        %1181 = vmatpush1.msra.mxu0 %v1180
        %1182 = vmatprep.subr.mxu0 0.0
        %v1183 = vand.u32 %v162, 4294901760
        %1184 = vmatpush1.msra.mxu0 %v1183
        %1185 = vmatprep.subr.mxu0 0.0
        %v1186 = vand.u32 %v163, 4294901760
        %1187 = vmatpush1.msra.mxu0 %v1186
        %1188 = vmatprep.subr.mxu0 0.0
        %v1189 = vand.u32 %v164, 4294901760
        %1190 = vmatpush1.msra.mxu0 %v1189
        %1191 = vmatprep.subr.mxu0 0.0
        %1192 = vmatpush1.msra.mxu0 0.0
        %1193 = vmatprep.subr.mxu0 0.0
        %1194 = vmatpush1.msra.mxu0 0.0
        %1195 = vmatprep.subr.mxu0 0.0
        %1196 = vmatpush1.msra.mxu0 0.0
        %1197 = vmatprep.subr.mxu0 0.0
        %1198 = vmatpush1.msra.mxu0 0.0
        %1199 = vmatprep.subr.mxu0 0.0
        %1200 = vmatpush1.msra.mxu0 0.0
        %1201 = vmatprep.subr.mxu0 0.0
        %1202 = vmatpush1.msra.mxu0 0.0
        %1203 = vmatprep.subr.mxu0 0.0
        %1204 = vmatpush1.msra.mxu0 0.0
        %1205 = vmatprep.subr.mxu0 0.0
        %1206 = vmatpush1.msra.mxu0 0.0
        %1207 = vmatprep.subr.mxu0 0.0
        %1208 = vmatpush1.msra.mxu0 0.0
        %1209 = vmatprep.subr.mxu0 0.0
        %1210 = vmatpush1.msra.mxu0 0.0
        %1211 = vmatprep.subr.mxu0 0.0
        %1212 = vmatpush1.msra.mxu0 0.0
        %1213 = vmatprep.subr.mxu0 0.0
        %1214 = vmatpush1.msra.mxu0 0.0
        %1215 = vmatprep.subr.mxu0 0.0
        %1216 = vmatpush1.msra.mxu0 0.0
        %1217 = vmatprep.subr.mxu0 0.0
        %1218 = vmatpush1.msra.mxu0 0.0
        %1219 = vmatprep.subr.mxu0 0.0
        %1220 = vmatpush1.msra.mxu0 0.0
        %1221 = vmatprep.subr.mxu0 0.0
        %1222 = vmatpush1.msra.mxu0 0.0
        %1223 = vmatprep.subr.mxu0 0.0
        %1224 = vmatpush1.msra.mxu0 0.0
        %1225 = vmatprep.subr.mxu0 0.0
        %1226 = vmatpush1.msra.mxu0 0.0
        %1227 = vmatprep.subr.mxu0 0.0
        %1228 = vmatpush1.msra.mxu0 0.0
        %1229 = vmatprep.subr.mxu0 0.0
        %1230 = vmatpush1.msra.mxu0 0.0
        %1231 = vmatprep.subr.mxu0 0.0
        %1232 = vmatpush1.msra.mxu0 0.0
        %1233 = vmatprep.subr.mxu0 0.0
        %1234 = vmatpush1.msra.mxu0 0.0
        %1235 = vmatprep.subr.mxu0 0.0
        %1236 = vmatpush1.msra.mxu0 0.0
        %1237 = vmatprep.subr.mxu0 0.0
        %1238 = vmatpush1.msra.mxu0 0.0
        %1239 = vmatprep.subr.mxu0 0.0
        %1240 = vmatpush1.msra.mxu0 0.0
        %1241 = vmatprep.subr.mxu0 0.0
        %1242 = vmatpush1.msra.mxu0 0.0
        %1243 = vmatprep.subr.mxu0 0.0
        %1244 = vmatpush1.msra.mxu0 0.0
        %1245 = vmatprep.subr.mxu0 0.0
        %1246 = vmatpush1.msra.mxu0 0.0
        %1247 = vmatprep.mubr.f32.mxu0 0.0
        %v1248 = vand.u32 %v167, 4294901760
        %1249 = vmatmul.mubr.f32.gmra.mrb[0].mxu0 %v1248
        %v1250 = vpop.f32.mrb[0].mxu0
        %v1251 = vadd.f32 %v1086, %v1250
        %v1252 = vpop.f32.mrb[0].mxu0
        %1253 = vmatprep.mubr.f32.mxu0 0.0
        %v1254 = vand.u32 %v170, 4294901760
        %1255 = vmatmul.mubr.f32.gmra.mrb[0].mxu0 %v1254
        %v1256 = vpop.f32.mrb[0].mxu0
        %v1257 = vadd.f32 %v1092, %v1256
        %v1258 = vpop.f32.mrb[0].mxu0
        %1259 = vmatprep.mubr.f32.mxu0 0.0
        %v1260 = vand.u32 %v173, 4294901760
        %1261 = vmatmul.mubr.f32.gmra.mrb[0].mxu0 %v1260
        %v1262 = vpop.f32.mrb[0].mxu0
        %v1263 = vadd.f32 %v1098, %v1262
        %v1264 = vpop.f32.mrb[0].mxu0
        %1265 = vmatprep.mubr.f32.mxu0 0.0
        %v1266 = vand.u32 %v176, 4294901760
        %1267 = vmatmul.mubr.f32.gmra.mrb[0].mxu0 %v1266
        %v1268 = vpop.f32.mrb[0].mxu0
        %v1269 = vadd.f32 %v1104, %v1268
        %v1270 = vpop.f32.mrb[0].mxu0
        %1271 = vmatprep.mubr.f32.mxu0 0.0
        %v1272 = vand.u32 %v179, 4294901760
        %1273 = vmatmul.mubr.f32.gmra.mrb[0].mxu0 %v1272
        %v1274 = vpop.f32.mrb[0].mxu0
        %v1275 = vadd.f32 %v1110, %v1274
        %v1276 = vpop.f32.mrb[0].mxu0
        %1277 = vmatprep.mubr.f32.mxu0 0.0
        %v1278 = vand.u32 %v182, 4294901760
        %1279 = vmatmul.mubr.f32.gmra.mrb[0].mxu0 %v1278
        %v1280 = vpop.f32.mrb[0].mxu0
        %v1281 = vadd.f32 %v1116, %v1280
        %v1282 = vpop.f32.mrb[0].mxu0
        %1283 = vmatprep.mubr.f32.mxu0 0.0
        %v1284 = vand.u32 %v185, 4294901760
        %1285 = vmatmul.mubr.f32.gmra.mrb[0].mxu0 %v1284
        %v1286 = vpop.f32.mrb[0].mxu0
        %v1287 = vadd.f32 %v1122, %v1286
        %v1288 = vpop.f32.mrb[0].mxu0
        %1289 = vmatprep.mubr.f32.mxu0 0.0
        %v1290 = vand.u32 %v188, 4294901760
        %1291 = vmatmul.mubr.f32.gmra.mrb[0].mxu0 %v1290
        %v1292 = vpop.f32.mrb[0].mxu0
        %v1293 = vadd.f32 %v1128, %v1292
        %v1294 = vpop.f32.mrb[0].mxu0
        %1295 = vmatprep.mubr.f32.mxu0 0.0
        %v1296 = vand.u32 %v191, 4294901760
        %1297 = vmatmul.mubr.f32.gmra.mrb[0].mxu0 %v1296
        %v1298 = vpop.f32.mrb[0].mxu0
        %v1299 = vadd.f32 %v1134, %v1298
        %v1300 = vpop.f32.mrb[0].mxu0
        %1301 = vmatprep.mubr.f32.mxu0 0.0
        %v1302 = vand.u32 %v194, 4294901760
        %1303 = vmatmul.mubr.f32.gmra.mrb[0].mxu0 %v1302
        %v1304 = vpop.f32.mrb[0].mxu0
        %v1305 = vadd.f32 %v1140, %v1304
        %v1306 = vpop.f32.mrb[0].mxu0
        %1307 = vmatprep.mubr.f32.mxu0 0.0
        %v1308 = vand.u32 %v197, 4294901760
        %1309 = vmatmul.mubr.f32.gmra.mrb[0].mxu0 %v1308
        %v1310 = vpop.f32.mrb[0].mxu0
        %v1311 = vadd.f32 %v1146, %v1310
        %v1312 = vpop.f32.mrb[0].mxu0
        %1313 = vmatprep.mubr.f32.mxu0 0.0
        %v1314 = vand.u32 %v200, 4294901760
        %1315 = vmatmul.mubr.f32.gmra.mrb[0].mxu0 %v1314
        %v1316 = vpop.f32.mrb[0].mxu0
        %v1317 = vadd.f32 %v1152, %v1316
        %v1318 = vpop.f32.mrb[0].mxu0
        %1319 = vmatprep.mubr.f32.mxu0 0.0
        %v1320 = vand.u32 %v203, 4294901760
        %1321 = vmatmul.mubr.f32.gmra.mrb[0].mxu0 %v1320
        %v1322 = vpop.f32.mrb[0].mxu0
        %v1323 = vadd.f32 %v1158, %v1322
        %v1324 = vpop.f32.mrb[0].mxu0
        %1325 = vmatprep.mubr.f32.mxu0 0.0
        %v1326 = vand.u32 %v206, 4294901760
        %1327 = vmatmul.mubr.f32.gmra.mrb[0].mxu0 %v1326
        %v1328 = vpop.f32.mrb[0].mxu0
        %v1329 = vadd.f32 %v1164, %v1328
        %v1330 = vpop.f32.mrb[0].mxu0
        %1331 = vmatprep.mubr.f32.mxu0 0.0
        %v1332 = vand.u32 %v209, 4294901760
        %1333 = vmatmul.mubr.f32.gmra.mrb[0].mxu0 %v1332
        %v1334 = vpop.f32.mrb[0].mxu0
        %v1335 = vadd.f32 %v1170, %v1334
        %v1336 = vpop.f32.mrb[0].mxu0
        %1337 = vmatprep.mubr.f32.mxu0 0.0
        %v1338 = vand.u32 %v212, 4294901760
        %1339 = vmatmul.mubr.f32.gmra.mrb[0].mxu0 %v1338
        %v1340 = vpop.f32.mrb[0].mxu0
        %v1341 = vadd.f32 %v1176, %v1340
        %v1342 = vpop.f32.mrb[0].mxu0
        %1343 = vdwg.mxu0
        %1344 = vst [vmem:[%s137] sm:$0xff] %v1251
        %1345 = vst [vmem:[%s137 + $0x8] sm:$0xff] %v1257
        %1346 = vst [vmem:[%s137 + $0x10] sm:$0xff] %v1263
        %1347 = vst [vmem:[%s137 + $0x18] sm:$0xff] %v1269
        %1348 = vst [vmem:[%s137 + $0x20] sm:$0xff] %v1275
        %1349 = vst [vmem:[%s137 + $0x28] sm:$0xff] %v1281
        %1350 = vst [vmem:[%s137 + $0x30] sm:$0xff] %v1287
        %1351 = vst [vmem:[%s137 + $0x38] sm:$0xff] %v1293
        %1352 = vst [vmem:[%s137 + $0x40] sm:$0xff] %v1299
        %1353 = vst [vmem:[%s137 + $0x48] sm:$0xff] %v1305
        %1354 = vst [vmem:[%s137 + $0x50] sm:$0xff] %v1311
        %1355 = vst [vmem:[%s137 + $0x58] sm:$0xff] %v1317
        %1356 = vst [vmem:[%s137 + $0x60] sm:$0xff] %v1323
        %1357 = vst [vmem:[%s137 + $0x68] sm:$0xff] %v1329
        %1358 = vst [vmem:[%s137 + $0x70] sm:$0xff] %v1335
        %1359 = vst [vmem:[%s137 + $0x78] sm:$0xff] %v1341
        %s1360 = sand.u32 %s71, 1
        %s1361 = scalar_lea.sflag [#allocation3], %s1360
        %s1362 = sand.u32 %s71, 1
        %s1363 = smul.addr %s1362, 128
        %s1364 = scalar_lea.vmem [#allocation2], %s1363
        // Predicated region
        $region29: #{tpu_custom_call.1} parent=27 // pred_check
          %p1365 = pneg %p81
        $region30: #{tpu_custom_call.1} parent=27 // pred_check_branch
          %1367 = sbr.rel (%p1365) target = $region32
        $region31: #{tpu_custom_call.1} parent=27 // pred_region
          %s1368 = smul.u32 16, %s16
          %s1370 = ssub.s32 2048, 2048
          %1371 = vsyncadd %s1361, %s1370
          %s1372 = smul.addr %s1368, 128
          %s1373 = scalar_lea.hbm %s2, %s1372
          %s1374 = sshll.u32 %s1364, 4
          %s1375 = int_to_ptr.vmem [resolvable:$true] %s1374
          %1380 = dma.vmem_to_hbm [thread:$0]  %s1375, 2048, %s1373, %s1361, 128, 128, 8
        $region32: #{tpu_custom_call.1} parent=27 // pred_fallthru
          _
      $region28: #{tpu_custom_call.1} parent=5 // pred_fallthru
        _
      %p1381 = scmp.le.s32.totalorder 2, %s11
      // Predicated region
      $region33: #{tpu_custom_call.1} parent=5 // pred_check
        %p1382 = pneg %p1381
      $region34: #{tpu_custom_call.1} parent=5 // pred_check_branch
        %1384 = sbr.rel (%p1382) target = $region36
      $region35: #{tpu_custom_call.1} parent=5 // pred_region
        %s1385 = ssub.s32 %s11, 2
        // Predicated region
        $region37: #{tpu_custom_call.1} parent=35 // pred_check
          %p1386 = pneg %p87
        $region38: #{tpu_custom_call.1} parent=35 // pred_check_branch
          %1388 = sbr.rel (%p1386) target = $region40
        $region39: #{tpu_custom_call.1} parent=35 // pred_region
          %s1389 = sand.u32 %s72, 1
          %s1390 = scalar_lea.sflag [#allocation3], %s1389
          %s1391 = sand.u32 %s72, 1
          %s1392 = smul.addr %s1391, 128
          %s1393 = scalar_lea.vmem [#allocation2], %s1392
          %1394 = dma.done %s1390, 2048
        $region40: #{tpu_custom_call.1} parent=35 // pred_fallthru
          _
      $region36: #{tpu_custom_call.1} parent=5 // pred_fallthru
        _
    $region6: #{tpu_custom_call.1} parent=1 // loop_footer
      %s15 = sadd.s32 1, %s11
    $region7: #{tpu_custom_call.1} parent=1 // loop_footer_branch
      %10 = sbr.rel target = $region3
    $region8: #{tpu_custom_call.1} parent=1 // loop_exit
      _
    %1395 = vsyncpa [#allocation3], 1
    %s1396 = scalar_lea.sflag [#allocation3], 1
    %1397 = vsyncpa %s1396, 1

</llo_original>
